<compile_context>
chip_gen: v5e
topology: v5e:2x2
jax: 0.10.0
libtpu: 0.0.40
codegen_flags: <defaults>
</compile_context>

<pallas_src>
import functools

import jax
import jax.numpy as jnp
from jax.experimental import pallas as pl
from jax.experimental.pallas import tpu as pltpu


_LANE = 128
_SUBLANE = 8
_SINGLE_TILE_MAX_ROWS = 256   # at or below this, run the whole batch in one grid step
_NEG_INF = -1e30              # bias padding value for the lane-padded softmax axis


def _round_up(n, m):
    return ((n + m - 1) // m) * m


def _vpu_supports_bf16():
    """bf16 elementwise (VPU) path exists on v6e/v7x; not on v5e or earlier."""
    try:
        kind = jax.devices()[0].device_kind.lower()
    except Exception:
        return False
    return not any(tag in kind for tag in ("v2", "v3", "v4", "v5"))


def _actor_kernel(x_ref, w1_ref, b1_ref, w2_ref, b2_ref, w3_ref, b3_ref, o_ref,
                  *, bf16_epilogue):
    # layer_1: bf16 MXU operands, f32 accumulation.
    x = x_ref[...].astype(jnp.bfloat16)
    h1 = jnp.dot(x, w1_ref[...], preferred_element_type=jnp.float32)
    if bf16_epilogue:
        # v6e/v7x: single f32->bf16 cast, then bias-add + ReLU in bf16.
        h1 = jnp.maximum(h1.astype(jnp.bfloat16) + b1_ref[...].astype(jnp.bfloat16), 0.0)
    else:
        # v5e: no bf16 VPU path -> keep the elementwise epilogue in f32.
        h1 = jnp.maximum(h1 + b1_ref[...], 0.0).astype(jnp.bfloat16)

    # layer_2
    h2 = jnp.dot(h1, w2_ref[...], preferred_element_type=jnp.float32)
    if bf16_epilogue:
        h2 = jnp.maximum(h2.astype(jnp.bfloat16) + b2_ref[...].astype(jnp.bfloat16), 0.0)
    else:
        h2 = jnp.maximum(h2 + b2_ref[...], 0.0).astype(jnp.bfloat16)

    # layer_3 + softmax over the lane-padded action axis.  Padded logits equal
    # -1e30 (zero weight columns + -1e30 bias) so exp() underflows to exactly 0
    # and the softmax over the padded axis equals the logical softmax.
    logits = jnp.dot(h2, w3_ref[...], preferred_element_type=jnp.float32) + b3_ref[...]
    m = jnp.max(logits, axis=-1, keepdims=True)
    e = jnp.exp(logits - m)
    denom = jnp.sum(e, axis=-1, keepdims=True)
    # Exact divide (NOT pl.reciprocal(approx=True)): rows must sum to 1.
    o_ref[...] = (e / denom).astype(o_ref.dtype)


def _choose_tiling(batch, tile_b):
    """Return (rows per tile, padded batch).

    Small batches -> a single grid step (no pipeline/per-step overhead and no
    near-empty padded tiles).  Large batches -> >= 2 tiles of up to `tile_b`
    rows so the 'parallel' batch axis can shard across both v7x TensorCores.
    """
    if batch <= _SINGLE_TILE_MAX_ROWS:
        tb = _round_up(batch, _SUBLANE)
        return tb, tb
    tb = min(tile_b, _round_up((batch + 1) // 2, _SUBLANE))
    return tb, _round_up(batch, tb)


@functools.partial(
    jax.jit,
    static_argnames=("action_dim", "tile_b", "bf16_epilogue", "single_buffer_weights"))
def _actor_forward_impl(x, params, *, action_dim, tile_b, bf16_epilogue,
                        single_buffer_weights):
    w1, b1, w2, b2, w3, b3 = (params["w1"], params["b1"], params["w2"],
                              params["b2"], params["w3"], params["b3"])
    B, state_dim = x.shape
    a_pad = w3.shape[1]

    tb, b_pad = _choose_tiling(B, tile_b)
    if b_pad != B:
        x = jnp.pad(x, ((0, b_pad - B), (0, 0)))
    grid = (b_pad // tb,)

    # Activations/outputs move with the grid; weights/biases use constant
    # index_maps (DMA'd once, resident in VMEM across all batch tiles) and,
    # when supported, a single buffer (they are never re-fetched).
    act_spec = pl.BlockSpec((tb, state_dim), lambda i: (i, 0))
    out_spec = pl.BlockSpec((tb, a_pad), lambda i: (i, 0))
    if single_buffer_weights:
        const = lambda a: pl.BlockSpec(a.shape, lambda i: (0, 0),
                                       pipeline_mode=pl.Buffered(1))
    else:
        const = lambda a: pl.BlockSpec(a.shape, lambda i: (0, 0))

    out = pl.pallas_call(
        functools.partial(_actor_kernel, bf16_epilogue=bf16_epilogue),
        out_shape=jax.ShapeDtypeStruct((b_pad, a_pad), jnp.float32),
        grid=grid,
        in_specs=[act_spec,
                  const(w1), const(b1),
                  const(w2), const(b2),
                  const(w3), const(b3)],
        out_specs=out_spec,
        compiler_params=pltpu.CompilerParams(
            dimension_semantics=("parallel",),      # batch axis -> both v7x TCs
            # Headroom for large batch tiles; still below v7x's 64 MiB physical VMEM.
            vmem_limit_bytes=48 * 1024 * 1024,
        ),
    )(x, w1, b1, w2, b2, w3, b3)

    # Drop batch padding and the lane padding of the action axis.
    return out[:B, :action_dim]


def actor_forward(x, params, action_dim, *, tile_b=512, bf16_epilogue=None):
    """x: (B, state_dim) float32.  params from init_actor_params.
    Returns softmax action probabilities of shape (B, action_dim)."""
    if bf16_epilogue is None:
        bf16_epilogue = _vpu_supports_bf16()
    try:
        return _actor_forward_impl(x, params, action_dim=action_dim, tile_b=tile_b,
                                   bf16_epilogue=bool(bf16_epilogue),
                                   single_buffer_weights=True)
    except Exception:
        # Fallback for toolchains without BlockSpec pipeline_mode support.
        return _actor_forward_impl(x, params, action_dim=action_dim, tile_b=tile_b,
                                   bf16_epilogue=bool(bf16_epilogue),
                                   single_buffer_weights=False)


def init_actor_params(key, state_dim, action_dim, hidden1=400, hidden2=300):
    """PyTorch nn.Linear-style init (U(-1/sqrt(fan_in), +bound)), weights stored
    transposed (in, out), zero-padded to lane multiples, cast to bf16; biases stay
    f32.  The layer-3 output axis is padded to 128 lanes with bias = -1e30 so the
    in-kernel softmax over the padded axis equals the logical softmax."""
    h1_pad = _round_up(hidden1, _LANE)       # 400 -> 512
    h2_pad = _round_up(hidden2, _LANE)       # 300 -> 384
    a_pad = _round_up(action_dim, _LANE)     # e.g. 8 -> 128

    def linear(k, fan_in, fan_out, in_pad, out_pad, pad_bias_value=0.0):
        kw, kb = jax.random.split(k)
        bound = 1.0 / float(fan_in) ** 0.5
        w = jax.random.uniform(kw, (fan_in, fan_out), jnp.float32, -bound, bound)
        b = jax.random.uniform(kb, (1, fan_out), jnp.float32, -bound, bound)
        w = jnp.pad(w, ((0, in_pad - fan_in), (0, out_pad - fan_out)))
        b = jnp.pad(b, ((0, 0), (0, out_pad - fan_out)),
                    constant_values=pad_bias_value)
        return w.astype(jnp.bfloat16), b      # weights bf16, biases f32

    k1, k2, k3 = jax.random.split(key, 3)
    w1, b1 = linear(k1, state_dim, hidden1, state_dim, h1_pad)
    w2, b2 = linear(k2, hidden1, hidden2, h1_pad, h2_pad)
    w3, b3 = linear(k3, hidden2, action_dim, h2_pad, a_pad, pad_bias_value=_NEG_INF)
    return {"w1": w1, "b1": b1, "w2": w2, "b2": b2, "w3": w3, "b3": b3}


def actor_reference(x, params, action_dim, *, bf16_epilogue):
    """Pure-JAX reference with the same mixed precision as the kernel."""
    h1 = jnp.dot(x.astype(jnp.bfloat16), params["w1"],
                 preferred_element_type=jnp.float32)
    if bf16_epilogue:
        h1 = jnp.maximum(h1.astype(jnp.bfloat16) + params["b1"].astype(jnp.bfloat16), 0.0)
    else:
        h1 = jnp.maximum(h1 + params["b1"], 0.0).astype(jnp.bfloat16)
    h2 = jnp.dot(h1, params["w2"], preferred_element_type=jnp.float32)
    if bf16_epilogue:
        h2 = jnp.maximum(h2.astype(jnp.bfloat16) + params["b2"].astype(jnp.bfloat16), 0.0)
    else:
        h2 = jnp.maximum(h2 + params["b2"], 0.0).astype(jnp.bfloat16)
    logits = jnp.dot(h2, params["w3"], preferred_element_type=jnp.float32) + params["b3"]
    return jax.nn.softmax(logits, axis=-1)[:, :action_dim]


if __name__ == "__main__":
    batch, state_dim, action_dim = 2, 16, 8

    key = jax.random.PRNGKey(0)
    kx, kp = jax.random.split(key)
    x = jax.random.normal(kx, (batch, state_dim), jnp.float32)
    params = init_actor_params(kp, state_dim, action_dim)

    bf16_epi = _vpu_supports_bf16()
    out = actor_forward(x, params, action_dim, bf16_epilogue=bf16_epi)
    out = jax.block_until_ready(out)

    assert out.shape == (batch, action_dim), out.shape

    # softmax rows sum to 1 (exact divide in the kernel now)
    row_sums = jnp.sum(out, axis=-1)
    assert bool(jnp.all(jnp.abs(row_sums - 1.0) < 1e-4)), row_sums

    # probabilities are non-negative
    assert bool(jnp.all(out >= 0.0))

    # correctness vs a pure-JAX reference at matching mixed precision
    ref = actor_reference(x, params, action_dim, bf16_epilogue=bf16_epi)
    max_err = float(jnp.max(jnp.abs(out - ref)))
    assert max_err < 2e-3, max_err

    print("KERNEL_OK")
</pallas_src>

<mosaic_0001>
module attributes {stable_mosaic.version = 11 : i64} {
  func.func @_actor_kernel(%arg0: i32, %arg1: memref<8x16xf32, #tpu.memory_space<vmem>>, %arg2: memref<16x512xbf16, #tpu.memory_space<vmem>>, %arg3: memref<1x512xf32, #tpu.memory_space<vmem>>, %arg4: memref<512x384xbf16, #tpu.memory_space<vmem>>, %arg5: memref<1x384xf32, #tpu.memory_space<vmem>>, %arg6: memref<384x128xbf16, #tpu.memory_space<vmem>>, %arg7: memref<1x128xf32, #tpu.memory_space<vmem>>, %arg8: memref<8x128xf32, #tpu.memory_space<vmem>>) attributes {dimension_semantics = [#tpu.dimension_semantics<parallel>], iteration_bounds = array<i64: 1>, scalar_prefetch = 0 : i64, scratch_operands = 0 : i64, tpu.core_type = #tpu.core_type<tc>, window_params = [{transform_indices = @transform_0, window_bounds = array<i64: 8, 16>}, {pipeline_mode = #tpu.pipeline_mode<synchronous>, transform_indices = @transform_1, window_bounds = array<i64: 16, 512>}, {pipeline_mode = #tpu.pipeline_mode<synchronous>, transform_indices = @transform_2, window_bounds = array<i64: 1, 512>}, {pipeline_mode = #tpu.pipeline_mode<synchronous>, transform_indices = @transform_3, window_bounds = array<i64: 512, 384>}, {pipeline_mode = #tpu.pipeline_mode<synchronous>, transform_indices = @transform_4, window_bounds = array<i64: 1, 384>}, {pipeline_mode = #tpu.pipeline_mode<synchronous>, transform_indices = @transform_5, window_bounds = array<i64: 384, 128>}, {pipeline_mode = #tpu.pipeline_mode<synchronous>, transform_indices = @transform_6, window_bounds = array<i64: 1, 128>}, {transform_indices = @transform_7, window_bounds = array<i64: 8, 128>}]} {
    %c0 = arith.constant 0 : index
    %c0_0 = arith.constant 0 : index
    %0 = vector.load %arg1[%c0, %c0_0] : memref<8x16xf32, #tpu.memory_space<vmem>>, vector<8x16xf32>
    %1 = arith.truncf %0 : vector<8x16xf32> to vector<8x16xbf16>
    %c0_1 = arith.constant 0 : index
    %c0_2 = arith.constant 0 : index
    %2 = vector.load %arg2[%c0_1, %c0_2] : memref<16x512xbf16, #tpu.memory_space<vmem>>, vector<16x512xbf16>
    %cst = arith.constant dense<0.000000e+00> : vector<8x512xf32>
    %3 = tpu.matmul %1, %2, %cst {dimension_numbers = #tpu.dot_dimension_numbers<[1], [0], [0], [1], [0, 0, 1, 1], [], []>} : vector<8x16xbf16>, vector<16x512xbf16>, vector<8x512xf32> -> vector<8x512xf32>
    %4 = arith.truncf %3 : vector<8x512xf32> to vector<8x512xbf16>
    %c0_3 = arith.constant 0 : index
    %c0_4 = arith.constant 0 : index
    %5 = vector.load %arg3[%c0_3, %c0_4] : memref<1x512xf32, #tpu.memory_space<vmem>>, vector<1x512xf32>
    %6 = arith.truncf %5 : vector<1x512xf32> to vector<1x512xbf16>
    %7 = vector.broadcast %6 : vector<1x512xbf16> to vector<8x512xbf16>
    %8 = arith.addf %4, %7 : vector<8x512xbf16>
    %cst_5 = arith.constant 0.000000e+00 : bf16
    %9 = vector.broadcast %cst_5 : bf16 to vector<8x512xbf16>
    %10 = arith.maximumf %8, %9 : vector<8x512xbf16>
    %c0_6 = arith.constant 0 : index
    %c0_7 = arith.constant 0 : index
    %11 = vector.load %arg4[%c0_6, %c0_7] : memref<512x384xbf16, #tpu.memory_space<vmem>>, vector<512x384xbf16>
    %cst_8 = arith.constant dense<0.000000e+00> : vector<8x384xf32>
    %12 = tpu.matmul %10, %11, %cst_8 {dimension_numbers = #tpu.dot_dimension_numbers<[1], [0], [0], [1], [0, 0, 1, 1], [], []>} : vector<8x512xbf16>, vector<512x384xbf16>, vector<8x384xf32> -> vector<8x384xf32>
    %13 = arith.truncf %12 : vector<8x384xf32> to vector<8x384xbf16>
    %c0_9 = arith.constant 0 : index
    %c0_10 = arith.constant 0 : index
    %14 = vector.load %arg5[%c0_9, %c0_10] : memref<1x384xf32, #tpu.memory_space<vmem>>, vector<1x384xf32>
    %15 = arith.truncf %14 : vector<1x384xf32> to vector<1x384xbf16>
    %16 = vector.broadcast %15 : vector<1x384xbf16> to vector<8x384xbf16>
    %17 = arith.addf %13, %16 : vector<8x384xbf16>
    %cst_11 = arith.constant 0.000000e+00 : bf16
    %18 = vector.broadcast %cst_11 : bf16 to vector<8x384xbf16>
    %19 = arith.maximumf %17, %18 : vector<8x384xbf16>
    %c0_12 = arith.constant 0 : index
    %c0_13 = arith.constant 0 : index
    %20 = vector.load %arg6[%c0_12, %c0_13] : memref<384x128xbf16, #tpu.memory_space<vmem>>, vector<384x128xbf16>
    %cst_14 = arith.constant dense<0.000000e+00> : vector<8x128xf32>
    %21 = tpu.matmul %19, %20, %cst_14 {dimension_numbers = #tpu.dot_dimension_numbers<[1], [0], [0], [1], [0, 0, 1, 1], [], []>} : vector<8x384xbf16>, vector<384x128xbf16>, vector<8x128xf32> -> vector<8x128xf32>
    %c0_15 = arith.constant 0 : index
    %c0_16 = arith.constant 0 : index
    %22 = vector.load %arg7[%c0_15, %c0_16] : memref<1x128xf32, #tpu.memory_space<vmem>>, vector<1x128xf32>
    %23 = vector.broadcast %22 : vector<1x128xf32> to vector<8x128xf32>
    %24 = arith.addf %21, %23 : vector<8x128xf32>
    %cst_17 = arith.constant dense<0xFF800000> : vector<8xf32>
    %25 = vector.multi_reduction <maximumf>, %24, %cst_17 [1] : vector<8x128xf32> to vector<8xf32>
    %26 = vector.shape_cast %25 : vector<8xf32> to vector<8x1xf32>
    %27 = vector.broadcast %26 : vector<8x1xf32> to vector<8x128xf32>
    %28 = arith.subf %24, %27 : vector<8x128xf32>
    %29 = math.exp %28 : vector<8x128xf32>
    %cst_18 = arith.constant dense<0.000000e+00> : vector<8xf32>
    %30 = vector.multi_reduction <add>, %29, %cst_18 [1] : vector<8x128xf32> to vector<8xf32>
    %31 = vector.shape_cast %30 : vector<8xf32> to vector<8x1xf32>
    %32 = vector.broadcast %31 : vector<8x1xf32> to vector<8x128xf32>
    %33 = arith.divf %29, %32 : vector<8x128xf32>
    %c0_19 = arith.constant 0 : index
    %c0_20 = arith.constant 0 : index
    %34 = vector.load %arg8[%c0_19, %c0_20] : memref<8x128xf32, #tpu.memory_space<vmem>>, vector<8x128xf32>
    tpu.vector_store %arg8[%c0_19, %c0_20], %33 {strides = array<i32>} : memref<8x128xf32, #tpu.memory_space<vmem>>, vector<8x128xf32>,
    return
  }
  func.func @transform_0(%arg0: i32) -> (i32, i32) {
    %c0_i32 = arith.constant 0 : i32
    %c0_i32_0 = arith.constant 0 : i32
    return %arg0, %c0_i32 : i32, i32
  }
  func.func @transform_1(%arg0: i32) -> (i32, i32) {
    %c0_i32 = arith.constant 0 : i32
    %c0_i32_0 = arith.constant 0 : i32
    %c0_i32_1 = arith.constant 0 : i32
    return %c0_i32, %c0_i32_0 : i32, i32
  }
  func.func @transform_2(%arg0: i32) -> (i32, i32) {
    %c0_i32 = arith.constant 0 : i32
    %c0_i32_0 = arith.constant 0 : i32
    %c0_i32_1 = arith.constant 0 : i32
    return %c0_i32, %c0_i32_0 : i32, i32
  }
  func.func @transform_3(%arg0: i32) -> (i32, i32) {
    %c0_i32 = arith.constant 0 : i32
    %c0_i32_0 = arith.constant 0 : i32
    %c0_i32_1 = arith.constant 0 : i32
    return %c0_i32, %c0_i32_0 : i32, i32
  }
  func.func @transform_4(%arg0: i32) -> (i32, i32) {
    %c0_i32 = arith.constant 0 : i32
    %c0_i32_0 = arith.constant 0 : i32
    %c0_i32_1 = arith.constant 0 : i32
    return %c0_i32, %c0_i32_0 : i32, i32
  }
  func.func @transform_5(%arg0: i32) -> (i32, i32) {
    %c0_i32 = arith.constant 0 : i32
    %c0_i32_0 = arith.constant 0 : i32
    %c0_i32_1 = arith.constant 0 : i32
    return %c0_i32, %c0_i32_0 : i32, i32
  }
  func.func @transform_6(%arg0: i32) -> (i32, i32) {
    %c0_i32 = arith.constant 0 : i32
    %c0_i32_0 = arith.constant 0 : i32
    %c0_i32_1 = arith.constant 0 : i32
    return %c0_i32, %c0_i32_0 : i32, i32
  }
  func.func @transform_7(%arg0: i32) -> (i32, i32) {
    %c0_i32 = arith.constant 0 : i32
    %c0_i32_0 = arith.constant 0 : i32
    return %arg0, %c0_i32 : i32, i32
  }
}

module attributes {stable_mosaic.version = 11 : i64} {
  func.func @_actor_kernel(%arg0: i32, %arg1: memref<8x16xf32, #tpu.memory_space<vmem>>, %arg2: memref<16x512xbf16, #tpu.memory_space<vmem>>, %arg3: memref<1x512xf32, #tpu.memory_space<vmem>>, %arg4: memref<512x384xbf16, #tpu.memory_space<vmem>>, %arg5: memref<1x384xf32, #tpu.memory_space<vmem>>, %arg6: memref<384x128xbf16, #tpu.memory_space<vmem>>, %arg7: memref<1x128xf32, #tpu.memory_space<vmem>>, %arg8: memref<8x128xf32, #tpu.memory_space<vmem>>) attributes {dimension_semantics = [#tpu.dimension_semantics<parallel>], iteration_bounds = array<i64: 1>, scalar_prefetch = 0 : i64, scratch_operands = 0 : i64, tpu.core_type = #tpu.core_type<tc>, window_params = [{transform_indices = @transform_0, window_bounds = array<i64: 8, 16>}, {pipeline_mode = #tpu.pipeline_mode<synchronous>, transform_indices = @transform_1, window_bounds = array<i64: 16, 512>}, {pipeline_mode = #tpu.pipeline_mode<synchronous>, transform_indices = @transform_2, window_bounds = array<i64: 1, 512>}, {pipeline_mode = #tpu.pipeline_mode<synchronous>, transform_indices = @transform_3, window_bounds = array<i64: 512, 384>}, {pipeline_mode = #tpu.pipeline_mode<synchronous>, transform_indices = @transform_4, window_bounds = array<i64: 1, 384>}, {pipeline_mode = #tpu.pipeline_mode<synchronous>, transform_indices = @transform_5, window_bounds = array<i64: 384, 128>}, {pipeline_mode = #tpu.pipeline_mode<synchronous>, transform_indices = @transform_6, window_bounds = array<i64: 1, 128>}, {transform_indices = @transform_7, window_bounds = array<i64: 8, 128>}]} {
    %c0 = arith.constant 0 : index
    %c0_0 = arith.constant 0 : index
    %0 = vector.load %arg1[%c0, %c0_0] : memref<8x16xf32, #tpu.memory_space<vmem>>, vector<8x16xf32>
    %1 = arith.truncf %0 : vector<8x16xf32> to vector<8x16xbf16>
    %c0_1 = arith.constant 0 : index
    %c0_2 = arith.constant 0 : index
    %2 = vector.load %arg2[%c0_1, %c0_2] : memref<16x512xbf16, #tpu.memory_space<vmem>>, vector<16x512xbf16>
    %cst = arith.constant dense<0.000000e+00> : vector<8x512xf32>
    %3 = tpu.matmul %1, %2, %cst {dimension_numbers = #tpu.dot_dimension_numbers<[1], [0], [0], [1], [0, 0, 1, 1], [], []>} : vector<8x16xbf16>, vector<16x512xbf16>, vector<8x512xf32> -> vector<8x512xf32>
    %4 = arith.truncf %3 : vector<8x512xf32> to vector<8x512xbf16>
    %c0_3 = arith.constant 0 : index
    %c0_4 = arith.constant 0 : index
    %5 = vector.load %arg3[%c0_3, %c0_4] : memref<1x512xf32, #tpu.memory_space<vmem>>, vector<1x512xf32>
    %6 = arith.truncf %5 : vector<1x512xf32> to vector<1x512xbf16>
    %7 = vector.broadcast %6 : vector<1x512xbf16> to vector<8x512xbf16>
    %8 = arith.addf %4, %7 : vector<8x512xbf16>
    %cst_5 = arith.constant 0.000000e+00 : bf16
    %9 = vector.broadcast %cst_5 : bf16 to vector<8x512xbf16>
    %10 = arith.maximumf %8, %9 : vector<8x512xbf16>
    %c0_6 = arith.constant 0 : index
    %c0_7 = arith.constant 0 : index
    %11 = vector.load %arg4[%c0_6, %c0_7] : memref<512x384xbf16, #tpu.memory_space<vmem>>, vector<512x384xbf16>
    %cst_8 = arith.constant dense<0.000000e+00> : vector<8x384xf32>
    %12 = tpu.matmul %10, %11, %cst_8 {dimension_numbers = #tpu.dot_dimension_numbers<[1], [0], [0], [1], [0, 0, 1, 1], [], []>} : vector<8x512xbf16>, vector<512x384xbf16>, vector<8x384xf32> -> vector<8x384xf32>
    %13 = arith.truncf %12 : vector<8x384xf32> to vector<8x384xbf16>
    %c0_9 = arith.constant 0 : index
    %c0_10 = arith.constant 0 : index
    %14 = vector.load %arg5[%c0_9, %c0_10] : memref<1x384xf32, #tpu.memory_space<vmem>>, vector<1x384xf32>
    %15 = arith.truncf %14 : vector<1x384xf32> to vector<1x384xbf16>
    %16 = vector.broadcast %15 : vector<1x384xbf16> to vector<8x384xbf16>
    %17 = arith.addf %13, %16 : vector<8x384xbf16>
    %cst_11 = arith.constant 0.000000e+00 : bf16
    %18 = vector.broadcast %cst_11 : bf16 to vector<8x384xbf16>
    %19 = arith.maximumf %17, %18 : vector<8x384xbf16>
    %c0_12 = arith.constant 0 : index
    %c0_13 = arith.constant 0 : index
    %20 = vector.load %arg6[%c0_12, %c0_13] : memref<384x128xbf16, #tpu.memory_space<vmem>>, vector<384x128xbf16>
    %cst_14 = arith.constant dense<0.000000e+00> : vector<8x128xf32>
    %21 = tpu.matmul %19, %20, %cst_14 {dimension_numbers = #tpu.dot_dimension_numbers<[1], [0], [0], [1], [0, 0, 1, 1], [], []>} : vector<8x384xbf16>, vector<384x128xbf16>, vector<8x128xf32> -> vector<8x128xf32>
    %c0_15 = arith.constant 0 : index
    %c0_16 = arith.constant 0 : index
    %22 = vector.load %arg7[%c0_15, %c0_16] : memref<1x128xf32, #tpu.memory_space<vmem>>, vector<1x128xf32>
    %23 = vector.broadcast %22 : vector<1x128xf32> to vector<8x128xf32>
    %24 = arith.addf %21, %23 : vector<8x128xf32>
    %cst_17 = arith.constant dense<0xFF800000> : vector<8xf32>
    %25 = vector.multi_reduction <maximumf>, %24, %cst_17 [1] : vector<8x128xf32> to vector<8xf32>
    %26 = vector.shape_cast %25 : vector<8xf32> to vector<8x1xf32>
    %27 = vector.broadcast %26 : vector<8x1xf32> to vector<8x128xf32>
    %28 = arith.subf %24, %27 : vector<8x128xf32>
    %29 = math.exp %28 : vector<8x128xf32>
    %cst_18 = arith.constant dense<0.000000e+00> : vector<8xf32>
    %30 = vector.multi_reduction <add>, %29, %cst_18 [1] : vector<8x128xf32> to vector<8xf32>
    %31 = vector.shape_cast %30 : vector<8xf32> to vector<8x1xf32>
    %32 = vector.broadcast %31 : vector<8x1xf32> to vector<8x128xf32>
    %33 = arith.divf %29, %32 : vector<8x128xf32>
    %c0_19 = arith.constant 0 : index
    %c0_20 = arith.constant 0 : index
    %34 = vector.load %arg8[%c0_19, %c0_20] : memref<8x128xf32, #tpu.memory_space<vmem>>, vector<8x128xf32>
    tpu.vector_store %arg8[%c0_19, %c0_20], %33 {strides = array<i32>} : memref<8x128xf32, #tpu.memory_space<vmem>>, vector<8x128xf32>,
    return
  }
  func.func @transform_0(%arg0: i32) -> (i32, i32) {
    %c0_i32 = arith.constant 0 : i32
    %c0_i32_0 = arith.constant 0 : i32
    return %arg0, %c0_i32 : i32, i32
  }
  func.func @transform_1(%arg0: i32) -> (i32, i32) {
    %c0_i32 = arith.constant 0 : i32
    %c0_i32_0 = arith.constant 0 : i32
    %c0_i32_1 = arith.constant 0 : i32
    return %c0_i32, %c0_i32_0 : i32, i32
  }
  func.func @transform_2(%arg0: i32) -> (i32, i32) {
    %c0_i32 = arith.constant 0 : i32
    %c0_i32_0 = arith.constant 0 : i32
    %c0_i32_1 = arith.constant 0 : i32
    return %c0_i32, %c0_i32_0 : i32, i32
  }
  func.func @transform_3(%arg0: i32) -> (i32, i32) {
    %c0_i32 = arith.constant 0 : i32
    %c0_i32_0 = arith.constant 0 : i32
    %c0_i32_1 = arith.constant 0 : i32
    return %c0_i32, %c0_i32_0 : i32, i32
  }
  func.func @transform_4(%arg0: i32) -> (i32, i32) {
    %c0_i32 = arith.constant 0 : i32
    %c0_i32_0 = arith.constant 0 : i32
    %c0_i32_1 = arith.constant 0 : i32
    return %c0_i32, %c0_i32_0 : i32, i32
  }
  func.func @transform_5(%arg0: i32) -> (i32, i32) {
    %c0_i32 = arith.constant 0 : i32
    %c0_i32_0 = arith.constant 0 : i32
    %c0_i32_1 = arith.constant 0 : i32
    return %c0_i32, %c0_i32_0 : i32, i32
  }
  func.func @transform_6(%arg0: i32) -> (i32, i32) {
    %c0_i32 = arith.constant 0 : i32
    %c0_i32_0 = arith.constant 0 : i32
    %c0_i32_1 = arith.constant 0 : i32
    return %c0_i32, %c0_i32_0 : i32, i32
  }
  func.func @transform_7(%arg0: i32) -> (i32, i32) {
    %c0_i32 = arith.constant 0 : i32
    %c0_i32_0 = arith.constant 0 : i32
    return %arg0, %c0_i32 : i32, i32
  }
}

</mosaic_0001>

<llo_original>
// kernel: _actor_forward_impl.1
$region0: #{_actor_forward_impl.1}
  #allocation0 [shape = 'u32[]', space=smem, size = 0x4, offset = 0x4, fixed_abs, tag = 'smem constant byte address 0x4 - core index']
  #allocation1 [shape = 'u32[72,128]{1,0:T(1,128)}', space=vmem, size = 0x9000, scoped, tag = 'internal scratch']
  %s0 = inlined_call_operand.vmem [shape: f32[8,16], index: 0, kind: input, shape index: {}]
  %s1 = inlined_call_operand.hbm [shape: bf16[16,512], index: 1, kind: input, shape index: {}]
  %s2 = inlined_call_operand.vmem [shape: f32[1,512], index: 2, kind: input, shape index: {}]
  %s3 = inlined_call_operand.hbm [shape: bf16[512,384], index: 3, kind: input, shape index: {}]
  %s4 = inlined_call_operand.vmem [shape: f32[1,384], index: 4, kind: input, shape index: {}]
  %s5 = inlined_call_operand.hbm [shape: bf16[384,128], index: 5, kind: input, shape index: {}]
  %s6 = inlined_call_operand.vmem [shape: f32[1,128], index: 6, kind: input, shape index: {}]
  %s7 = inlined_call_operand.vmem [shape: f32[8,128], index: 7, kind: output, shape index: {}]
  %s8 = sld [smem:[#allocation0]]
  $region50: #{_actor_forward_impl.1} parent=0
    _
  %s10 = ssub.s32 1, %s8
  %s11 = scalar_select 0, %s10, %s8
  $region1: #{_actor_forward_impl.1} parent=0
    #allocation2 [shape = 'u8[16384]{0}', space=vmem, size = 0x4000, scoped, tag = 'input window, operand 1, single buffered']
    #allocation3 [shape = 's32[1]{0}', space=sflag, size = 0x4, scoped, tag = 'scoped memory for _actor_forward_impl.1']
    #allocation4 [shape = 'u8[393216]{0}', space=vmem, size = 0x60000, scoped, tag = 'input window, operand 3, single buffered']
    #allocation5 [shape = 's32[1]{0}', space=sflag, size = 0x4, scoped, tag = 'scoped memory for _actor_forward_impl.1']
    #allocation6 [shape = 'u8[98304]{0}', space=vmem, size = 0x18000, scoped, tag = 'input window, operand 5, single buffered']
    %12 = vsyncpa [#allocation3], 0
    %13 = vsyncpa [#allocation5], 0
    // Predicated region
    $region2: #{_actor_forward_impl.1} parent=1 // pred_check
      _
    $region3: #{_actor_forward_impl.1} parent=1 // pred_check_branch
      %15 = sbr.rel (0) target = $region5
    $region4: #{_actor_forward_impl.1} parent=1 // pred_region
      _
    $region5: #{_actor_forward_impl.1} parent=1 // pred_fallthru
      _
    // Predicated region
    $region6: #{_actor_forward_impl.1} parent=1 // pred_check
      _
    $region7: #{_actor_forward_impl.1} parent=1 // pred_check_branch
      %17 = sbr.rel (0) target = $region9
    $region8: #{_actor_forward_impl.1} parent=1 // pred_region
      %19 = vsyncadd [#allocation3], 0
      %s20 = sshll.u32 %s1, 4
      %s21 = int_to_ptr.hbm [resolvable:$true] %s20
      %s22 = sshll.u32 [#allocation2], 4
      %s23 = int_to_ptr.vmem [resolvable:$true] %s22
      %28 = dma.hbm_to_vmem [thread:$0]  %s21, 512, %s23, [#allocation3], 256, 256, 16
    $region9: #{_actor_forward_impl.1} parent=1 // pred_fallthru
      _
    // Predicated region
    $region10: #{_actor_forward_impl.1} parent=1 // pred_check
      _
    $region11: #{_actor_forward_impl.1} parent=1 // pred_check_branch
      %30 = sbr.rel (0) target = $region13
    $region12: #{_actor_forward_impl.1} parent=1 // pred_region
      _
    $region13: #{_actor_forward_impl.1} parent=1 // pred_fallthru
      _
    // Predicated region
    $region14: #{_actor_forward_impl.1} parent=1 // pred_check
      _
    $region15: #{_actor_forward_impl.1} parent=1 // pred_check_branch
      %32 = sbr.rel (0) target = $region17
    $region16: #{_actor_forward_impl.1} parent=1 // pred_region
      %34 = vsyncadd [#allocation5], 0
      %s35 = sshll.u32 %s3, 4
      %s36 = int_to_ptr.hbm [resolvable:$true] %s35
      %s37 = sshll.u32 [#allocation4], 4
      %s38 = int_to_ptr.vmem [resolvable:$true] %s37
      %43 = dma.hbm_to_vmem [thread:$0]  %s36, 12288, %s38, [#allocation5], 192, 192, 12
    $region17: #{_actor_forward_impl.1} parent=1 // pred_fallthru
      _
    // Predicated region
    $region18: #{_actor_forward_impl.1} parent=1 // pred_check
      _
    $region19: #{_actor_forward_impl.1} parent=1 // pred_check_branch
      %45 = sbr.rel (0) target = $region21
    $region20: #{_actor_forward_impl.1} parent=1 // pred_region
      _
    $region21: #{_actor_forward_impl.1} parent=1 // pred_fallthru
      _
    // Predicated region
    $region22: #{_actor_forward_impl.1} parent=1 // pred_check
      _
    $region23: #{_actor_forward_impl.1} parent=1 // pred_check_branch
      %47 = sbr.rel (0) target = $region25
    $region24: #{_actor_forward_impl.1} parent=1 // pred_region
      %49 = vsyncadd [#allocation5], 0
      %s50 = sshll.u32 %s5, 4
      %s51 = int_to_ptr.hbm [resolvable:$true] %s50
      %s52 = sshll.u32 [#allocation6], 4
      %s53 = int_to_ptr.vmem [resolvable:$true] %s52
      %58 = dma.hbm_to_vmem [thread:$0]  %s51, 3072, %s53, [#allocation5], 64, 64, 4
    $region25: #{_actor_forward_impl.1} parent=1 // pred_fallthru
      _
    // Predicated region
    $region26: #{_actor_forward_impl.1} parent=1 // pred_check
      _
    $region27: #{_actor_forward_impl.1} parent=1 // pred_check_branch
      %60 = sbr.rel (0) target = $region29
    $region28: #{_actor_forward_impl.1} parent=1 // pred_region
      _
    $region29: #{_actor_forward_impl.1} parent=1 // pred_fallthru
      _
    // Predicated region
    $region30: #{_actor_forward_impl.1} parent=1 // pred_check
      _
    $region31: #{_actor_forward_impl.1} parent=1 // pred_check_branch
      %62 = sbr.rel (0) target = $region33
    $region32: #{_actor_forward_impl.1} parent=1 // pred_region
      %64 = dma.done [#allocation3], 512
    $region33: #{_actor_forward_impl.1} parent=1 // pred_fallthru
      _
    // Predicated region
    $region34: #{_actor_forward_impl.1} parent=1 // pred_check
      _
    $region35: #{_actor_forward_impl.1} parent=1 // pred_check_branch
      %66 = sbr.rel (0) target = $region37
    $region36: #{_actor_forward_impl.1} parent=1 // pred_region
      %68 = dma.done [#allocation5], 12288
    $region37: #{_actor_forward_impl.1} parent=1 // pred_fallthru
      _
    // Predicated region
    $region38: #{_actor_forward_impl.1} parent=1 // pred_check
      _
    $region39: #{_actor_forward_impl.1} parent=1 // pred_check_branch
      %70 = sbr.rel (0) target = $region41
    $region40: #{_actor_forward_impl.1} parent=1 // pred_region
      %72 = dma.done [#allocation5], 3072
    $region41: #{_actor_forward_impl.1} parent=1 // pred_fallthru
      _
    %v74 = vld [vmem:[%s0] sm:$0xff]
    %v75 = vpack.c.bf16 %v74, %v74
    %v76 = vld [vmem:[#allocation2] sm:$0xff]
    %v77 = vld [vmem:[#allocation2 + $0x8] sm:$0xff]
    %v78 = vld [vmem:[#allocation2 + $0x10] sm:$0xff]
    %v79 = vld [vmem:[#allocation2 + $0x18] sm:$0xff]
    %v84 = vunpack.c.l.b16 %v76
    %v85 = vunpack.c.h.b16 %v76
    %v86 = vunpack.c.l.b16 %v77
    %v87 = vunpack.c.h.b16 %v77
    %v88 = vunpack.c.l.b16 %v78
    %v89 = vunpack.c.h.b16 %v78
    %v90 = vunpack.c.l.b16 %v79
    %v91 = vunpack.c.h.b16 %v79
    %v92 = vpack.c.b16 %v88, %v84
    %v93 = vpack.c.b16 %v89, %v85
    %v94 = vpack.c.b16 %v90, %v86
    %v95 = vpack.c.b16 %v91, %v87
    %vm100 = vcmask 130048
    %v102 = vsel %vm100, %v75, 0
    %104 = vmatpush.bf16.msra.mxu0 0
    %105 = vmatpush.bf16.msra.mxu0 0
    %106 = vmatpush.bf16.msra.mxu0 0
    %107 = vmatpush.bf16.msra.mxu0 0
    %108 = vmatpush.bf16.msra.mxu0 0
    %109 = vmatpush.bf16.msra.mxu0 0
    %110 = vmatpush.bf16.msra.mxu0 0
    %111 = vmatpush.bf16.msra.mxu0 %v92
    %112 = vmatmul.bf16.gmra.mxu0 %v102
    %v113 = vpop.f32.mrf.mxu0
    %v114 = vadd.f32 0.0, %v113
    %v115 = vpop.f32.mrf.mxu0
    %116 = vdwg.mxu0
    %117 = vmatpush.bf16.msra.mxu0 0
    %118 = vmatpush.bf16.msra.mxu0 0
    %119 = vmatpush.bf16.msra.mxu0 0
    %120 = vmatpush.bf16.msra.mxu0 0
    %121 = vmatpush.bf16.msra.mxu0 0
    %122 = vmatpush.bf16.msra.mxu0 0
    %123 = vmatpush.bf16.msra.mxu0 0
    %124 = vmatpush.bf16.msra.mxu0 %v93
    %125 = vmatmul.bf16.gmra.mxu0 %v102
    %v126 = vpop.f32.mrf.mxu0
    %v127 = vadd.f32 0.0, %v126
    %v128 = vpop.f32.mrf.mxu0
    %129 = vdwg.mxu0
    %130 = vmatpush.bf16.msra.mxu0 0
    %131 = vmatpush.bf16.msra.mxu0 0
    %132 = vmatpush.bf16.msra.mxu0 0
    %133 = vmatpush.bf16.msra.mxu0 0
    %134 = vmatpush.bf16.msra.mxu0 0
    %135 = vmatpush.bf16.msra.mxu0 0
    %136 = vmatpush.bf16.msra.mxu0 0
    %137 = vmatpush.bf16.msra.mxu0 %v94
    %138 = vmatmul.bf16.gmra.mxu0 %v102
    %v139 = vpop.f32.mrf.mxu0
    %v140 = vadd.f32 0.0, %v139
    %v141 = vpop.f32.mrf.mxu0
    %142 = vdwg.mxu0
    %143 = vmatpush.bf16.msra.mxu0 0
    %144 = vmatpush.bf16.msra.mxu0 0
    %145 = vmatpush.bf16.msra.mxu0 0
    %146 = vmatpush.bf16.msra.mxu0 0
    %147 = vmatpush.bf16.msra.mxu0 0
    %148 = vmatpush.bf16.msra.mxu0 0
    %149 = vmatpush.bf16.msra.mxu0 0
    %150 = vmatpush.bf16.msra.mxu0 %v95
    %151 = vmatmul.bf16.gmra.mxu0 %v102
    %v152 = vpop.f32.mrf.mxu0
    %v153 = vadd.f32 0.0, %v152
    %v154 = vpop.f32.mrf.mxu0
    %155 = vdwg.mxu0
    %v156 = vpack.c.bf16 %v127, %v114
    %v157 = vpack.c.bf16 %v153, %v140
    %v158 = vld [vmem:[%s2] sm:$0xf]
    %v160 = vperm.slane %v158, 0
    %v161 = vperm.slane %v158, 1
    %v162 = vperm.slane %v158, 2
    %v163 = vperm.slane %v158, 3
    %v168 = vpack.c.bf16 %v161, %v160
    %v169 = vpack.c.bf16 %v163, %v162
    %v172 = vunpack.c.l.b16 %v168
    %v173 = vunpack.c.h.b16 %v168
    %v174 = vunpack.c.l.b16 %v169
    %v175 = vunpack.c.h.b16 %v169
    %v176 = vpack.c.b16 %v172, %v172
    %v177 = vpack.c.b16 %v173, %v173
    %v178 = vpack.c.b16 %v174, %v174
    %v179 = vpack.c.b16 %v175, %v175
    %v181 = vpack.i.b16 %v176, %v176
    %v183 = vperm.slane %v181, 0
    %v185 = vpack.i.b16 %v177, %v177
    %v187 = vperm.slane %v185, 0
    %v189 = vpack.i.b16 %v178, %v178
    %v191 = vperm.slane %v189, 0
    %v193 = vpack.i.b16 %v179, %v179
    %v195 = vperm.slane %v193, 0
    %v196 = vunpack.c.l.bf16 %v156
    %v197 = vunpack.c.h.bf16 %v156
    %v198 = vunpack.c.l.bf16 %v157
    %v199 = vunpack.c.h.bf16 %v157
    %v200 = vunpack.c.l.bf16 %v183
    %v201 = vunpack.c.l.bf16 %v187
    %v202 = vunpack.c.l.bf16 %v191
    %v203 = vunpack.c.l.bf16 %v195
    %v204 = vadd.f32 %v196, %v200
    %v205 = vadd.f32 %v197, %v201
    %v206 = vadd.f32 %v198, %v202
    %v207 = vadd.f32 %v199, %v203
    %v208 = vpack.c.bf16 %v205, %v204
    %v209 = vpack.c.bf16 %v207, %v206
    %v210 = vunpack.c.l.bf16 %v208
    %v211 = vunpack.c.h.bf16 %v208
    %v212 = vunpack.c.l.bf16 %v209
    %v213 = vunpack.c.h.bf16 %v209
    %v214 = vmax.f32 %v210, 0.0
    %v215 = vmax.f32 %v211, 0.0
    %v216 = vmax.f32 %v212, 0.0
    %v217 = vmax.f32 %v213, 0.0
    %v218 = vpack.c.bf16 %v214, %v214
    %v219 = vpack.c.bf16 %v215, %v215
    %v220 = vpack.c.bf16 %v216, %v216
    %v221 = vpack.c.bf16 %v217, %v217
    %v222 = vld [vmem:[#allocation4] sm:$0xff]
    %v223 = vld [vmem:[#allocation4 + $0x8] sm:$0xf]
    %v224 = vld [vmem:[#allocation4 + $0xc] sm:$0xff]
    %v225 = vld [vmem:[#allocation4 + $0x14] sm:$0xf]
    %v226 = vld [vmem:[#allocation4 + $0x18] sm:$0xff]
    %v227 = vld [vmem:[#allocation4 + $0x20] sm:$0xf]
    %v228 = vld [vmem:[#allocation4 + $0x24] sm:$0xff]
    %v229 = vld [vmem:[#allocation4 + $0x2c] sm:$0xf]
    %v230 = vld [vmem:[#allocation4 + $0x30] sm:$0xff]
    %v231 = vld [vmem:[#allocation4 + $0x38] sm:$0xf]
    %v232 = vld [vmem:[#allocation4 + $0x3c] sm:$0xff]
    %v233 = vld [vmem:[#allocation4 + $0x44] sm:$0xf]
    %v234 = vld [vmem:[#allocation4 + $0x48] sm:$0xff]
    %v235 = vld [vmem:[#allocation4 + $0x50] sm:$0xf]
    %v236 = vld [vmem:[#allocation4 + $0x54] sm:$0xff]
    %v237 = vld [vmem:[#allocation4 + $0x5c] sm:$0xf]
    %v238 = vld [vmem:[#allocation4 + $0x60] sm:$0xff]
    %v239 = vld [vmem:[#allocation4 + $0x68] sm:$0xf]
    %v240 = vld [vmem:[#allocation4 + $0x6c] sm:$0xff]
    %v241 = vld [vmem:[#allocation4 + $0x74] sm:$0xf]
    %v242 = vld [vmem:[#allocation4 + $0x78] sm:$0xff]
    %v243 = vld [vmem:[#allocation4 + $0x80] sm:$0xf]
    %v244 = vld [vmem:[#allocation4 + $0x84] sm:$0xff]
    %v245 = vld [vmem:[#allocation4 + $0x8c] sm:$0xf]
    %v246 = vld [vmem:[#allocation4 + $0x90] sm:$0xff]
    %v247 = vld [vmem:[#allocation4 + $0x98] sm:$0xf]
    %v248 = vld [vmem:[#allocation4 + $0x9c] sm:$0xff]
    %v249 = vld [vmem:[#allocation4 + $0xa4] sm:$0xf]
    %v250 = vld [vmem:[#allocation4 + $0xa8] sm:$0xff]
    %v251 = vld [vmem:[#allocation4 + $0xb0] sm:$0xf]
    %v252 = vld [vmem:[#allocation4 + $0xb4] sm:$0xff]
    %v253 = vld [vmem:[#allocation4 + $0xbc] sm:$0xf]
    %v254 = vld [vmem:[#allocation4 + $0xc0] sm:$0xff]
    %v255 = vld [vmem:[#allocation4 + $0xc8] sm:$0xf]
    %v256 = vld [vmem:[#allocation4 + $0xcc] sm:$0xff]
    %v257 = vld [vmem:[#allocation4 + $0xd4] sm:$0xf]
    %v258 = vld [vmem:[#allocation4 + $0xd8] sm:$0xff]
    %v259 = vld [vmem:[#allocation4 + $0xe0] sm:$0xf]
    %v260 = vld [vmem:[#allocation4 + $0xe4] sm:$0xff]
    %v261 = vld [vmem:[#allocation4 + $0xec] sm:$0xf]
    %v262 = vld [vmem:[#allocation4 + $0xf0] sm:$0xff]
    %v263 = vld [vmem:[#allocation4 + $0xf8] sm:$0xf]
    %v264 = vld [vmem:[#allocation4 + $0xfc] sm:$0xff]
    %v265 = vld [vmem:[#allocation4 + $0x104] sm:$0xf]
    %v266 = vld [vmem:[#allocation4 + $0x108] sm:$0xff]
    %v267 = vld [vmem:[#allocation4 + $0x110] sm:$0xf]
    %v268 = vld [vmem:[#allocation4 + $0x114] sm:$0xff]
    %v269 = vld [vmem:[#allocation4 + $0x11c] sm:$0xf]
    %v270 = vld [vmem:[#allocation4 + $0x120] sm:$0xff]
    %v271 = vld [vmem:[#allocation4 + $0x128] sm:$0xf]
    %v272 = vld [vmem:[#allocation4 + $0x12c] sm:$0xff]
    %v273 = vld [vmem:[#allocation4 + $0x134] sm:$0xf]
    %v274 = vld [vmem:[#allocation4 + $0x138] sm:$0xff]
    %v275 = vld [vmem:[#allocation4 + $0x140] sm:$0xf]
    %v276 = vld [vmem:[#allocation4 + $0x144] sm:$0xff]
    %v277 = vld [vmem:[#allocation4 + $0x14c] sm:$0xf]
    %v278 = vld [vmem:[#allocation4 + $0x150] sm:$0xff]
    %v279 = vld [vmem:[#allocation4 + $0x158] sm:$0xf]
    %v280 = vld [vmem:[#allocation4 + $0x15c] sm:$0xff]
    %v281 = vld [vmem:[#allocation4 + $0x164] sm:$0xf]
    %v282 = vld [vmem:[#allocation4 + $0x168] sm:$0xff]
    %v283 = vld [vmem:[#allocation4 + $0x170] sm:$0xf]
    %v284 = vld [vmem:[#allocation4 + $0x174] sm:$0xff]
    %v285 = vld [vmem:[#allocation4 + $0x17c] sm:$0xf]
    %v286 = vld [vmem:[#allocation4 + $0x180] sm:$0xff]
    %v287 = vld [vmem:[#allocation4 + $0x188] sm:$0xf]
    %v288 = vld [vmem:[#allocation4 + $0x18c] sm:$0xff]
    %v289 = vld [vmem:[#allocation4 + $0x194] sm:$0xf]
    %v290 = vld [vmem:[#allocation4 + $0x198] sm:$0xff]
    %v291 = vld [vmem:[#allocation4 + $0x1a0] sm:$0xf]
    %v292 = vld [vmem:[#allocation4 + $0x1a4] sm:$0xff]
    %v293 = vld [vmem:[#allocation4 + $0x1ac] sm:$0xf]
    %v294 = vld [vmem:[#allocation4 + $0x1b0] sm:$0xff]
    %v295 = vld [vmem:[#allocation4 + $0x1b8] sm:$0xf]
    %v296 = vld [vmem:[#allocation4 + $0x1bc] sm:$0xff]
    %v297 = vld [vmem:[#allocation4 + $0x1c4] sm:$0xf]
    %v298 = vld [vmem:[#allocation4 + $0x1c8] sm:$0xff]
    %v299 = vld [vmem:[#allocation4 + $0x1d0] sm:$0xf]
    %v300 = vld [vmem:[#allocation4 + $0x1d4] sm:$0xff]
    %v301 = vld [vmem:[#allocation4 + $0x1dc] sm:$0xf]
    %v302 = vld [vmem:[#allocation4 + $0x1e0] sm:$0xff]
    %v303 = vld [vmem:[#allocation4 + $0x1e8] sm:$0xf]
    %v304 = vld [vmem:[#allocation4 + $0x1ec] sm:$0xff]
    %v305 = vld [vmem:[#allocation4 + $0x1f4] sm:$0xf]
    %v306 = vld [vmem:[#allocation4 + $0x1f8] sm:$0xff]
    %v307 = vld [vmem:[#allocation4 + $0x200] sm:$0xf]
    %v308 = vld [vmem:[#allocation4 + $0x204] sm:$0xff]
    %v309 = vld [vmem:[#allocation4 + $0x20c] sm:$0xf]
    %v310 = vld [vmem:[#allocation4 + $0x210] sm:$0xff]
    %v311 = vld [vmem:[#allocation4 + $0x218] sm:$0xf]
    %v312 = vld [vmem:[#allocation4 + $0x21c] sm:$0xff]
    %v313 = vld [vmem:[#allocation4 + $0x224] sm:$0xf]
    %v314 = vld [vmem:[#allocation4 + $0x228] sm:$0xff]
    %v315 = vld [vmem:[#allocation4 + $0x230] sm:$0xf]
    %v316 = vld [vmem:[#allocation4 + $0x234] sm:$0xff]
    %v317 = vld [vmem:[#allocation4 + $0x23c] sm:$0xf]
    %v318 = vld [vmem:[#allocation4 + $0x240] sm:$0xff]
    %v319 = vld [vmem:[#allocation4 + $0x248] sm:$0xf]
    %v320 = vld [vmem:[#allocation4 + $0x24c] sm:$0xff]
    %v321 = vld [vmem:[#allocation4 + $0x254] sm:$0xf]
    %v322 = vld [vmem:[#allocation4 + $0x258] sm:$0xff]
    %v323 = vld [vmem:[#allocation4 + $0x260] sm:$0xf]
    %v324 = vld [vmem:[#allocation4 + $0x264] sm:$0xff]
    %v325 = vld [vmem:[#allocation4 + $0x26c] sm:$0xf]
    %v326 = vld [vmem:[#allocation4 + $0x270] sm:$0xff]
    %v327 = vld [vmem:[#allocation4 + $0x278] sm:$0xf]
    %v328 = vld [vmem:[#allocation4 + $0x27c] sm:$0xff]
    %v329 = vld [vmem:[#allocation4 + $0x284] sm:$0xf]
    %v330 = vld [vmem:[#allocation4 + $0x288] sm:$0xff]
    %v331 = vld [vmem:[#allocation4 + $0x290] sm:$0xf]
    %v332 = vld [vmem:[#allocation4 + $0x294] sm:$0xff]
    %v333 = vld [vmem:[#allocation4 + $0x29c] sm:$0xf]
    %v334 = vld [vmem:[#allocation4 + $0x2a0] sm:$0xff]
    %v335 = vld [vmem:[#allocation4 + $0x2a8] sm:$0xf]
    %v336 = vld [vmem:[#allocation4 + $0x2ac] sm:$0xff]
    %v337 = vld [vmem:[#allocation4 + $0x2b4] sm:$0xf]
    %v338 = vld [vmem:[#allocation4 + $0x2b8] sm:$0xff]
    %v339 = vld [vmem:[#allocation4 + $0x2c0] sm:$0xf]
    %v340 = vld [vmem:[#allocation4 + $0x2c4] sm:$0xff]
    %v341 = vld [vmem:[#allocation4 + $0x2cc] sm:$0xf]
    %v342 = vld [vmem:[#allocation4 + $0x2d0] sm:$0xff]
    %v343 = vld [vmem:[#allocation4 + $0x2d8] sm:$0xf]
    %v344 = vld [vmem:[#allocation4 + $0x2dc] sm:$0xff]
    %v345 = vld [vmem:[#allocation4 + $0x2e4] sm:$0xf]
    %v346 = vld [vmem:[#allocation4 + $0x2e8] sm:$0xff]
    %v347 = vld [vmem:[#allocation4 + $0x2f0] sm:$0xf]
    %v348 = vld [vmem:[#allocation4 + $0x2f4] sm:$0xff]
    %v349 = vld [vmem:[#allocation4 + $0x2fc] sm:$0xf]
    %v478 = vunpack.c.l.b16 %v222
    %v479 = vunpack.c.h.b16 %v222
    %v480 = vunpack.c.l.b16 %v223
    %v481 = vunpack.c.l.b16 %v224
    %v482 = vunpack.c.h.b16 %v224
    %v483 = vunpack.c.l.b16 %v225
    %v484 = vunpack.c.l.b16 %v226
    %v485 = vunpack.c.h.b16 %v226
    %v486 = vunpack.c.l.b16 %v227
    %v487 = vunpack.c.l.b16 %v228
    %v488 = vunpack.c.h.b16 %v228
    %v489 = vunpack.c.l.b16 %v229
    %v490 = vunpack.c.l.b16 %v230
    %v491 = vunpack.c.h.b16 %v230
    %v492 = vunpack.c.l.b16 %v231
    %v493 = vunpack.c.l.b16 %v232
    %v494 = vunpack.c.h.b16 %v232
    %v495 = vunpack.c.l.b16 %v233
    %v496 = vunpack.c.l.b16 %v234
    %v497 = vunpack.c.h.b16 %v234
    %v498 = vunpack.c.l.b16 %v235
    %v499 = vunpack.c.l.b16 %v236
    %v500 = vunpack.c.h.b16 %v236
    %v501 = vunpack.c.l.b16 %v237
    %v502 = vunpack.c.l.b16 %v238
    %v503 = vunpack.c.h.b16 %v238
    %v504 = vunpack.c.l.b16 %v239
    %v505 = vunpack.c.l.b16 %v240
    %v506 = vunpack.c.h.b16 %v240
    %v507 = vunpack.c.l.b16 %v241
    %v508 = vunpack.c.l.b16 %v242
    %v509 = vunpack.c.h.b16 %v242
    %v510 = vunpack.c.l.b16 %v243
    %v511 = vunpack.c.l.b16 %v244
    %v512 = vunpack.c.h.b16 %v244
    %v513 = vunpack.c.l.b16 %v245
    %v514 = vunpack.c.l.b16 %v246
    %v515 = vunpack.c.h.b16 %v246
    %v516 = vunpack.c.l.b16 %v247
    %v517 = vunpack.c.l.b16 %v248
    %v518 = vunpack.c.h.b16 %v248
    %v519 = vunpack.c.l.b16 %v249
    %v520 = vunpack.c.l.b16 %v250
    %v521 = vunpack.c.h.b16 %v250
    %v522 = vunpack.c.l.b16 %v251
    %v523 = vunpack.c.l.b16 %v252
    %v524 = vunpack.c.h.b16 %v252
    %v525 = vunpack.c.l.b16 %v253
    %v526 = vunpack.c.l.b16 %v254
    %v527 = vunpack.c.h.b16 %v254
    %v528 = vunpack.c.l.b16 %v255
    %v529 = vunpack.c.l.b16 %v256
    %v530 = vunpack.c.h.b16 %v256
    %v531 = vunpack.c.l.b16 %v257
    %v532 = vunpack.c.l.b16 %v258
    %v533 = vunpack.c.h.b16 %v258
    %v534 = vunpack.c.l.b16 %v259
    %v535 = vunpack.c.l.b16 %v260
    %v536 = vunpack.c.h.b16 %v260
    %v537 = vunpack.c.l.b16 %v261
    %v538 = vunpack.c.l.b16 %v262
    %v539 = vunpack.c.h.b16 %v262
    %v540 = vunpack.c.l.b16 %v263
    %v541 = vunpack.c.l.b16 %v264
    %v542 = vunpack.c.h.b16 %v264
    %v543 = vunpack.c.l.b16 %v265
    %v544 = vunpack.c.l.b16 %v266
    %v545 = vunpack.c.h.b16 %v266
    %v546 = vunpack.c.l.b16 %v267
    %v547 = vunpack.c.l.b16 %v268
    %v548 = vunpack.c.h.b16 %v268
    %v549 = vunpack.c.l.b16 %v269
    %v550 = vunpack.c.l.b16 %v270
    %v551 = vunpack.c.h.b16 %v270
    %v552 = vunpack.c.l.b16 %v271
    %v553 = vunpack.c.l.b16 %v272
    %v554 = vunpack.c.h.b16 %v272
    %v555 = vunpack.c.l.b16 %v273
    %v556 = vunpack.c.l.b16 %v274
    %v557 = vunpack.c.h.b16 %v274
    %v558 = vunpack.c.l.b16 %v275
    %v559 = vunpack.c.l.b16 %v276
    %v560 = vunpack.c.h.b16 %v276
    %v561 = vunpack.c.l.b16 %v277
    %v562 = vunpack.c.l.b16 %v278
    %v563 = vunpack.c.h.b16 %v278
    %v564 = vunpack.c.l.b16 %v279
    %v565 = vunpack.c.l.b16 %v280
    %v566 = vunpack.c.h.b16 %v280
    %v567 = vunpack.c.l.b16 %v281
    %v568 = vunpack.c.l.b16 %v282
    %v569 = vunpack.c.h.b16 %v282
    %v570 = vunpack.c.l.b16 %v283
    %v571 = vunpack.c.l.b16 %v284
    %v572 = vunpack.c.h.b16 %v284
    %v573 = vunpack.c.l.b16 %v285
    %v574 = vunpack.c.l.b16 %v286
    %v575 = vunpack.c.h.b16 %v286
    %v576 = vunpack.c.l.b16 %v287
    %v577 = vunpack.c.l.b16 %v288
    %v578 = vunpack.c.h.b16 %v288
    %v579 = vunpack.c.l.b16 %v289
    %v580 = vunpack.c.l.b16 %v290
    %v581 = vunpack.c.h.b16 %v290
    %v582 = vunpack.c.l.b16 %v291
    %v583 = vunpack.c.l.b16 %v292
    %v584 = vunpack.c.h.b16 %v292
    %v585 = vunpack.c.l.b16 %v293
    %v586 = vunpack.c.l.b16 %v294
    %v587 = vunpack.c.h.b16 %v294
    %v588 = vunpack.c.l.b16 %v295
    %v589 = vunpack.c.l.b16 %v296
    %v590 = vunpack.c.h.b16 %v296
    %v591 = vunpack.c.l.b16 %v297
    %v592 = vunpack.c.l.b16 %v298
    %v593 = vunpack.c.h.b16 %v298
    %v594 = vunpack.c.l.b16 %v299
    %v595 = vunpack.c.l.b16 %v300
    %v596 = vunpack.c.h.b16 %v300
    %v597 = vunpack.c.l.b16 %v301
    %v598 = vunpack.c.l.b16 %v302
    %v599 = vunpack.c.h.b16 %v302
    %v600 = vunpack.c.l.b16 %v303
    %v601 = vunpack.c.l.b16 %v304
    %v602 = vunpack.c.h.b16 %v304
    %v603 = vunpack.c.l.b16 %v305
    %v604 = vunpack.c.l.b16 %v306
    %v605 = vunpack.c.h.b16 %v306
    %v606 = vunpack.c.l.b16 %v307
    %v607 = vunpack.c.l.b16 %v308
    %v608 = vunpack.c.h.b16 %v308
    %v609 = vunpack.c.l.b16 %v309
    %v610 = vunpack.c.l.b16 %v310
    %v611 = vunpack.c.h.b16 %v310
    %v612 = vunpack.c.l.b16 %v311
    %v613 = vunpack.c.l.b16 %v312
    %v614 = vunpack.c.h.b16 %v312
    %v615 = vunpack.c.l.b16 %v313
    %v616 = vunpack.c.l.b16 %v314
    %v617 = vunpack.c.h.b16 %v314
    %v618 = vunpack.c.l.b16 %v315
    %v619 = vunpack.c.l.b16 %v316
    %v620 = vunpack.c.h.b16 %v316
    %v621 = vunpack.c.l.b16 %v317
    %v622 = vunpack.c.l.b16 %v318
    %v623 = vunpack.c.h.b16 %v318
    %v624 = vunpack.c.l.b16 %v319
    %v625 = vunpack.c.l.b16 %v320
    %v626 = vunpack.c.h.b16 %v320
    %v627 = vunpack.c.l.b16 %v321
    %v628 = vunpack.c.l.b16 %v322
    %v629 = vunpack.c.h.b16 %v322
    %v630 = vunpack.c.l.b16 %v323
    %v631 = vunpack.c.l.b16 %v324
    %v632 = vunpack.c.h.b16 %v324
    %v633 = vunpack.c.l.b16 %v325
    %v634 = vunpack.c.l.b16 %v326
    %v635 = vunpack.c.h.b16 %v326
    %v636 = vunpack.c.l.b16 %v327
    %v637 = vunpack.c.l.b16 %v328
    %v638 = vunpack.c.h.b16 %v328
    %v639 = vunpack.c.l.b16 %v329
    %v640 = vunpack.c.l.b16 %v330
    %v641 = vunpack.c.h.b16 %v330
    %v642 = vunpack.c.l.b16 %v331
    %v643 = vunpack.c.l.b16 %v332
    %v644 = vunpack.c.h.b16 %v332
    %v645 = vunpack.c.l.b16 %v333
    %v646 = vunpack.c.l.b16 %v334
    %v647 = vunpack.c.h.b16 %v334
    %v648 = vunpack.c.l.b16 %v335
    %v649 = vunpack.c.l.b16 %v336
    %v650 = vunpack.c.h.b16 %v336
    %v651 = vunpack.c.l.b16 %v337
    %v652 = vunpack.c.l.b16 %v338
    %v653 = vunpack.c.h.b16 %v338
    %v654 = vunpack.c.l.b16 %v339
    %v655 = vunpack.c.l.b16 %v340
    %v656 = vunpack.c.h.b16 %v340
    %v657 = vunpack.c.l.b16 %v341
    %v658 = vunpack.c.l.b16 %v342
    %v659 = vunpack.c.h.b16 %v342
    %v660 = vunpack.c.l.b16 %v343
    %v661 = vunpack.c.l.b16 %v344
    %v662 = vunpack.c.h.b16 %v344
    %v663 = vunpack.c.l.b16 %v345
    %v664 = vunpack.c.l.b16 %v346
    %v665 = vunpack.c.h.b16 %v346
    %v666 = vunpack.c.l.b16 %v347
    %v667 = vunpack.c.l.b16 %v348
    %v668 = vunpack.c.h.b16 %v348
    %v669 = vunpack.c.l.b16 %v349
    %v670 = vpack.c.b16 %v481, %v478
    %v671 = vpack.c.b16 %v482, %v479
    %v672 = vpack.c.b16 %v483, %v480
    %v673 = vpack.c.b16 %v487, %v484
    %v674 = vpack.c.b16 %v488, %v485
    %v675 = vpack.c.b16 %v489, %v486
    %v676 = vpack.c.b16 %v493, %v490
    %v677 = vpack.c.b16 %v494, %v491
    %v678 = vpack.c.b16 %v495, %v492
    %v679 = vpack.c.b16 %v499, %v496
    %v680 = vpack.c.b16 %v500, %v497
    %v681 = vpack.c.b16 %v501, %v498
    %v682 = vpack.c.b16 %v505, %v502
    %v683 = vpack.c.b16 %v506, %v503
    %v684 = vpack.c.b16 %v507, %v504
    %v685 = vpack.c.b16 %v511, %v508
    %v686 = vpack.c.b16 %v512, %v509
    %v687 = vpack.c.b16 %v513, %v510
    %v688 = vpack.c.b16 %v517, %v514
    %v689 = vpack.c.b16 %v518, %v515
    %v690 = vpack.c.b16 %v519, %v516
    %v691 = vpack.c.b16 %v523, %v520
    %v692 = vpack.c.b16 %v524, %v521
    %v693 = vpack.c.b16 %v525, %v522
    %v694 = vpack.c.b16 %v529, %v526
    %v695 = vpack.c.b16 %v530, %v527
    %v696 = vpack.c.b16 %v531, %v528
    %v697 = vpack.c.b16 %v535, %v532
    %v698 = vpack.c.b16 %v536, %v533
    %v699 = vpack.c.b16 %v537, %v534
    %v700 = vpack.c.b16 %v541, %v538
    %v701 = vpack.c.b16 %v542, %v539
    %v702 = vpack.c.b16 %v543, %v540
    %v703 = vpack.c.b16 %v547, %v544
    %v704 = vpack.c.b16 %v548, %v545
    %v705 = vpack.c.b16 %v549, %v546
    %v706 = vpack.c.b16 %v553, %v550
    %v707 = vpack.c.b16 %v554, %v551
    %v708 = vpack.c.b16 %v555, %v552
    %v709 = vpack.c.b16 %v559, %v556
    %v710 = vpack.c.b16 %v560, %v557
    %v711 = vpack.c.b16 %v561, %v558
    %v712 = vpack.c.b16 %v565, %v562
    %v713 = vpack.c.b16 %v566, %v563
    %v714 = vpack.c.b16 %v567, %v564
    %v715 = vpack.c.b16 %v571, %v568
    %v716 = vpack.c.b16 %v572, %v569
    %v717 = vpack.c.b16 %v573, %v570
    %v718 = vpack.c.b16 %v577, %v574
    %v719 = vpack.c.b16 %v578, %v575
    %v720 = vpack.c.b16 %v579, %v576
    %v721 = vpack.c.b16 %v583, %v580
    %v722 = vpack.c.b16 %v584, %v581
    %v723 = vpack.c.b16 %v585, %v582
    %v724 = vpack.c.b16 %v589, %v586
    %v725 = vpack.c.b16 %v590, %v587
    %v726 = vpack.c.b16 %v591, %v588
    %v727 = vpack.c.b16 %v595, %v592
    %v728 = vpack.c.b16 %v596, %v593
    %v729 = vpack.c.b16 %v597, %v594
    %v730 = vpack.c.b16 %v601, %v598
    %v731 = vpack.c.b16 %v602, %v599
    %v732 = vpack.c.b16 %v603, %v600
    %v733 = vpack.c.b16 %v607, %v604
    %v734 = vpack.c.b16 %v608, %v605
    %v735 = vpack.c.b16 %v609, %v606
    %v736 = vpack.c.b16 %v613, %v610
    %v737 = vpack.c.b16 %v614, %v611
    %v738 = vpack.c.b16 %v615, %v612
    %v739 = vpack.c.b16 %v619, %v616
    %v740 = vpack.c.b16 %v620, %v617
    %v741 = vpack.c.b16 %v621, %v618
    %v742 = vpack.c.b16 %v625, %v622
    %v743 = vpack.c.b16 %v626, %v623
    %v744 = vpack.c.b16 %v627, %v624
    %v745 = vpack.c.b16 %v631, %v628
    %v746 = vpack.c.b16 %v632, %v629
    %v747 = vpack.c.b16 %v633, %v630
    %v748 = vpack.c.b16 %v637, %v634
    %v749 = vpack.c.b16 %v638, %v635
    %v750 = vpack.c.b16 %v639, %v636
    %v751 = vpack.c.b16 %v643, %v640
    %v752 = vpack.c.b16 %v644, %v641
    %v753 = vpack.c.b16 %v645, %v642
    %v754 = vpack.c.b16 %v649, %v646
    %v755 = vpack.c.b16 %v650, %v647
    %v756 = vpack.c.b16 %v651, %v648
    %v757 = vpack.c.b16 %v655, %v652
    %v758 = vpack.c.b16 %v656, %v653
    %v759 = vpack.c.b16 %v657, %v654
    %v760 = vpack.c.b16 %v661, %v658
    %v761 = vpack.c.b16 %v662, %v659
    %v762 = vpack.c.b16 %v663, %v660
    %v763 = vpack.c.b16 %v667, %v664
    %v764 = vpack.c.b16 %v668, %v665
    %v765 = vpack.c.b16 %v669, %v666
    %862 = vmatpush.bf16.msra.mxu0 %v691
    %863 = vmatpush.bf16.msra.mxu0 %v688
    %864 = vmatpush.bf16.msra.mxu0 %v685
    %865 = vmatpush.bf16.msra.mxu0 %v682
    %866 = vmatpush.bf16.msra.mxu0 %v679
    %867 = vmatpush.bf16.msra.mxu0 %v676
    %868 = vmatpush.bf16.msra.mxu0 %v673
    %869 = vmatpush.bf16.msra.mxu0 %v670
    %870 = vmatmul.bf16.gmra.mxu0 %v218
    %v871 = vpop.f32.mrf.mxu0
    %v872 = vadd.f32 0.0, %v871
    %v873 = vpop.f32.mrf.mxu0
    %874 = vdwg.mxu0
    %875 = vmatpush.bf16.msra.mxu0 %v715
    %876 = vmatpush.bf16.msra.mxu0 %v712
    %877 = vmatpush.bf16.msra.mxu0 %v709
    %878 = vmatpush.bf16.msra.mxu0 %v706
    %879 = vmatpush.bf16.msra.mxu0 %v703
    %880 = vmatpush.bf16.msra.mxu0 %v700
    %881 = vmatpush.bf16.msra.mxu0 %v697
    %882 = vmatpush.bf16.msra.mxu0 %v694
    %883 = vmatmul.bf16.gmra.mxu0 %v219
    %v884 = vpop.f32.mrf.mxu0
    %v885 = vadd.f32 %v872, %v884
    %v886 = vpop.f32.mrf.mxu0
    %887 = vdwg.mxu0
    %888 = vmatpush.bf16.msra.mxu0 %v739
    %889 = vmatpush.bf16.msra.mxu0 %v736
    %890 = vmatpush.bf16.msra.mxu0 %v733
    %891 = vmatpush.bf16.msra.mxu0 %v730
    %892 = vmatpush.bf16.msra.mxu0 %v727
    %893 = vmatpush.bf16.msra.mxu0 %v724
    %894 = vmatpush.bf16.msra.mxu0 %v721
    %895 = vmatpush.bf16.msra.mxu0 %v718
    %896 = vmatmul.bf16.gmra.mxu0 %v220
    %v897 = vpop.f32.mrf.mxu0
    %v898 = vadd.f32 %v885, %v897
    %v899 = vpop.f32.mrf.mxu0
    %900 = vdwg.mxu0
    %901 = vmatpush.bf16.msra.mxu0 %v763
    %902 = vmatpush.bf16.msra.mxu0 %v760
    %903 = vmatpush.bf16.msra.mxu0 %v757
    %904 = vmatpush.bf16.msra.mxu0 %v754
    %905 = vmatpush.bf16.msra.mxu0 %v751
    %906 = vmatpush.bf16.msra.mxu0 %v748
    %907 = vmatpush.bf16.msra.mxu0 %v745
    %908 = vmatpush.bf16.msra.mxu0 %v742
    %909 = vmatmul.bf16.gmra.mxu0 %v221
    %v910 = vpop.f32.mrf.mxu0
    %v911 = vadd.f32 %v898, %v910
    %v912 = vpop.f32.mrf.mxu0
    %913 = vdwg.mxu0
    %914 = vmatpush.bf16.msra.mxu0 %v692
    %915 = vmatpush.bf16.msra.mxu0 %v689
    %916 = vmatpush.bf16.msra.mxu0 %v686
    %917 = vmatpush.bf16.msra.mxu0 %v683
    %918 = vmatpush.bf16.msra.mxu0 %v680
    %919 = vmatpush.bf16.msra.mxu0 %v677
    %920 = vmatpush.bf16.msra.mxu0 %v674
    %921 = vmatpush.bf16.msra.mxu0 %v671
    %922 = vmatmul.bf16.gmra.mxu0 %v218
    %v923 = vpop.f32.mrf.mxu0
    %v924 = vadd.f32 0.0, %v923
    %v925 = vpop.f32.mrf.mxu0
    %926 = vdwg.mxu0
    %927 = vmatpush.bf16.msra.mxu0 %v716
    %928 = vmatpush.bf16.msra.mxu0 %v713
    %929 = vmatpush.bf16.msra.mxu0 %v710
    %930 = vmatpush.bf16.msra.mxu0 %v707
    %931 = vmatpush.bf16.msra.mxu0 %v704
    %932 = vmatpush.bf16.msra.mxu0 %v701
    %933 = vmatpush.bf16.msra.mxu0 %v698
    %934 = vmatpush.bf16.msra.mxu0 %v695
    %935 = vmatmul.bf16.gmra.mxu0 %v219
    %v936 = vpop.f32.mrf.mxu0
    %v937 = vadd.f32 %v924, %v936
    %v938 = vpop.f32.mrf.mxu0
    %939 = vdwg.mxu0
    %940 = vmatpush.bf16.msra.mxu0 %v740
    %941 = vmatpush.bf16.msra.mxu0 %v737
    %942 = vmatpush.bf16.msra.mxu0 %v734
    %943 = vmatpush.bf16.msra.mxu0 %v731
    %944 = vmatpush.bf16.msra.mxu0 %v728
    %945 = vmatpush.bf16.msra.mxu0 %v725
    %946 = vmatpush.bf16.msra.mxu0 %v722
    %947 = vmatpush.bf16.msra.mxu0 %v719
    %948 = vmatmul.bf16.gmra.mxu0 %v220
    %v949 = vpop.f32.mrf.mxu0
    %v950 = vadd.f32 %v937, %v949
    %v951 = vpop.f32.mrf.mxu0
    %952 = vdwg.mxu0
    %953 = vmatpush.bf16.msra.mxu0 %v764
    %954 = vmatpush.bf16.msra.mxu0 %v761
    %955 = vmatpush.bf16.msra.mxu0 %v758
    %956 = vmatpush.bf16.msra.mxu0 %v755
    %957 = vmatpush.bf16.msra.mxu0 %v752
    %958 = vmatpush.bf16.msra.mxu0 %v749
    %959 = vmatpush.bf16.msra.mxu0 %v746
    %960 = vmatpush.bf16.msra.mxu0 %v743
    %961 = vmatmul.bf16.gmra.mxu0 %v221
    %v962 = vpop.f32.mrf.mxu0
    %v963 = vadd.f32 %v950, %v962
    %v964 = vpop.f32.mrf.mxu0
    %965 = vdwg.mxu0
    %966 = vmatpush.bf16.msra.mxu0 %v693
    %967 = vmatpush.bf16.msra.mxu0 %v690
    %968 = vmatpush.bf16.msra.mxu0 %v687
    %969 = vmatpush.bf16.msra.mxu0 %v684
    %970 = vmatpush.bf16.msra.mxu0 %v681
    %971 = vmatpush.bf16.msra.mxu0 %v678
    %972 = vmatpush.bf16.msra.mxu0 %v675
    %973 = vmatpush.bf16.msra.mxu0 %v672
    %974 = vmatmul.bf16.gmra.mxu0 %v218
    %v975 = vpop.f32.mrf.mxu0
    %v976 = vadd.f32 0.0, %v975
    %v977 = vpop.f32.mrf.mxu0
    %978 = vdwg.mxu0
    %979 = vmatpush.bf16.msra.mxu0 %v717
    %980 = vmatpush.bf16.msra.mxu0 %v714
    %981 = vmatpush.bf16.msra.mxu0 %v711
    %982 = vmatpush.bf16.msra.mxu0 %v708
    %983 = vmatpush.bf16.msra.mxu0 %v705
    %984 = vmatpush.bf16.msra.mxu0 %v702
    %985 = vmatpush.bf16.msra.mxu0 %v699
    %986 = vmatpush.bf16.msra.mxu0 %v696
    %987 = vmatmul.bf16.gmra.mxu0 %v219
    %v988 = vpop.f32.mrf.mxu0
    %v989 = vadd.f32 %v976, %v988
    %v990 = vpop.f32.mrf.mxu0
    %991 = vdwg.mxu0
    %992 = vmatpush.bf16.msra.mxu0 %v741
    %993 = vmatpush.bf16.msra.mxu0 %v738
    %994 = vmatpush.bf16.msra.mxu0 %v735
    %995 = vmatpush.bf16.msra.mxu0 %v732
    %996 = vmatpush.bf16.msra.mxu0 %v729
    %997 = vmatpush.bf16.msra.mxu0 %v726
    %998 = vmatpush.bf16.msra.mxu0 %v723
    %999 = vmatpush.bf16.msra.mxu0 %v720
    %1000 = vmatmul.bf16.gmra.mxu0 %v220
    %v1001 = vpop.f32.mrf.mxu0
    %v1002 = vadd.f32 %v989, %v1001
    %v1003 = vpop.f32.mrf.mxu0
    %1004 = vdwg.mxu0
    %1005 = vmatpush.bf16.msra.mxu0 %v765
    %1006 = vmatpush.bf16.msra.mxu0 %v762
    %1007 = vmatpush.bf16.msra.mxu0 %v759
    %1008 = vmatpush.bf16.msra.mxu0 %v756
    %1009 = vmatpush.bf16.msra.mxu0 %v753
    %1010 = vmatpush.bf16.msra.mxu0 %v750
    %1011 = vmatpush.bf16.msra.mxu0 %v747
    %1012 = vmatpush.bf16.msra.mxu0 %v744
    %1013 = vmatmul.bf16.gmra.mxu0 %v221
    %v1014 = vpop.f32.mrf.mxu0
    %v1015 = vadd.f32 %v1002, %v1014
    %v1016 = vpop.f32.mrf.mxu0
    %1017 = vdwg.mxu0
    %v1018 = vpack.c.bf16 %v963, %v911
    %v1019 = vpack.c.bf16 %v1015, %v1015
    %v1020 = vld [vmem:[%s4] sm:$0x7]
    %v1022 = vperm.slane %v1020, 0
    %v1023 = vperm.slane %v1020, 1
    %v1024 = vperm.slane %v1020, 2
    %v1028 = vpack.c.bf16 %v1023, %v1022
    %v1029 = vpack.c.bf16 %v1024, %v1024
    %v1032 = vunpack.c.l.b16 %v1028
    %v1033 = vunpack.c.h.b16 %v1028
    %v1034 = vunpack.c.l.b16 %v1029
    %v1035 = vpack.c.b16 %v1032, %v1032
    %v1036 = vpack.c.b16 %v1033, %v1033
    %v1037 = vpack.c.b16 %v1034, %v1034
    %v1039 = vpack.i.b16 %v1035, %v1035
    %v1041 = vperm.slane %v1039, 0
    %v1043 = vpack.i.b16 %v1036, %v1036
    %v1045 = vperm.slane %v1043, 0
    %v1047 = vpack.i.b16 %v1037, %v1037
    %v1049 = vperm.slane %v1047, 0
    %v1050 = vunpack.c.l.bf16 %v1018
    %v1051 = vunpack.c.h.bf16 %v1018
    %v1052 = vunpack.c.l.bf16 %v1019
    %v1053 = vunpack.c.l.bf16 %v1041
    %v1054 = vunpack.c.l.bf16 %v1045
    %v1055 = vunpack.c.l.bf16 %v1049
    %v1056 = vadd.f32 %v1050, %v1053
    %v1057 = vadd.f32 %v1051, %v1054
    %v1058 = vadd.f32 %v1052, %v1055
    %v1059 = vpack.c.bf16 %v1057, %v1056
    %v1060 = vpack.c.bf16 %v1058, %v1058
    %v1061 = vunpack.c.l.bf16 %v1059
    %v1062 = vunpack.c.h.bf16 %v1059
    %v1063 = vunpack.c.l.bf16 %v1060
    %v1064 = vmax.f32 %v1061, 0.0
    %v1065 = vmax.f32 %v1062, 0.0
    %v1066 = vmax.f32 %v1063, 0.0
    %v1067 = vpack.c.bf16 %v1064, %v1064
    %v1068 = vpack.c.bf16 %v1065, %v1065
    %v1069 = vpack.c.bf16 %v1066, %v1066
    %v1070 = vld [vmem:[#allocation6] sm:$0xf]
    %v1071 = vld [vmem:[#allocation6 + $0x4] sm:$0xf]
    %v1072 = vld [vmem:[#allocation6 + $0x8] sm:$0xf]
    %v1073 = vld [vmem:[#allocation6 + $0xc] sm:$0xf]
    %v1074 = vld [vmem:[#allocation6 + $0x10] sm:$0xf]
    %v1075 = vld [vmem:[#allocation6 + $0x14] sm:$0xf]
    %v1076 = vld [vmem:[#allocation6 + $0x18] sm:$0xf]
    %v1077 = vld [vmem:[#allocation6 + $0x1c] sm:$0xf]
    %v1078 = vld [vmem:[#allocation6 + $0x20] sm:$0xf]
    %v1079 = vld [vmem:[#allocation6 + $0x24] sm:$0xf]
    %v1080 = vld [vmem:[#allocation6 + $0x28] sm:$0xf]
    %v1081 = vld [vmem:[#allocation6 + $0x2c] sm:$0xf]
    %v1082 = vld [vmem:[#allocation6 + $0x30] sm:$0xf]
    %v1083 = vld [vmem:[#allocation6 + $0x34] sm:$0xf]
    %v1084 = vld [vmem:[#allocation6 + $0x38] sm:$0xf]
    %v1085 = vld [vmem:[#allocation6 + $0x3c] sm:$0xf]
    %v1086 = vld [vmem:[#allocation6 + $0x40] sm:$0xf]
    %v1087 = vld [vmem:[#allocation6 + $0x44] sm:$0xf]
    %v1088 = vld [vmem:[#allocation6 + $0x48] sm:$0xf]
    %v1089 = vld [vmem:[#allocation6 + $0x4c] sm:$0xf]
    %v1090 = vld [vmem:[#allocation6 + $0x50] sm:$0xf]
    %v1091 = vld [vmem:[#allocation6 + $0x54] sm:$0xf]
    %v1092 = vld [vmem:[#allocation6 + $0x58] sm:$0xf]
    %v1093 = vld [vmem:[#allocation6 + $0x5c] sm:$0xf]
    %v1094 = vld [vmem:[#allocation6 + $0x60] sm:$0xf]
    %v1095 = vld [vmem:[#allocation6 + $0x64] sm:$0xf]
    %v1096 = vld [vmem:[#allocation6 + $0x68] sm:$0xf]
    %v1097 = vld [vmem:[#allocation6 + $0x6c] sm:$0xf]
    %v1098 = vld [vmem:[#allocation6 + $0x70] sm:$0xf]
    %v1099 = vld [vmem:[#allocation6 + $0x74] sm:$0xf]
    %v1100 = vld [vmem:[#allocation6 + $0x78] sm:$0xf]
    %v1101 = vld [vmem:[#allocation6 + $0x7c] sm:$0xf]
    %v1102 = vld [vmem:[#allocation6 + $0x80] sm:$0xf]
    %v1103 = vld [vmem:[#allocation6 + $0x84] sm:$0xf]
    %v1104 = vld [vmem:[#allocation6 + $0x88] sm:$0xf]
    %v1105 = vld [vmem:[#allocation6 + $0x8c] sm:$0xf]
    %v1106 = vld [vmem:[#allocation6 + $0x90] sm:$0xf]
    %v1107 = vld [vmem:[#allocation6 + $0x94] sm:$0xf]
    %v1108 = vld [vmem:[#allocation6 + $0x98] sm:$0xf]
    %v1109 = vld [vmem:[#allocation6 + $0x9c] sm:$0xf]
    %v1110 = vld [vmem:[#allocation6 + $0xa0] sm:$0xf]
    %v1111 = vld [vmem:[#allocation6 + $0xa4] sm:$0xf]
    %v1112 = vld [vmem:[#allocation6 + $0xa8] sm:$0xf]
    %v1113 = vld [vmem:[#allocation6 + $0xac] sm:$0xf]
    %v1114 = vld [vmem:[#allocation6 + $0xb0] sm:$0xf]
    %v1115 = vld [vmem:[#allocation6 + $0xb4] sm:$0xf]
    %v1116 = vld [vmem:[#allocation6 + $0xb8] sm:$0xf]
    %v1117 = vld [vmem:[#allocation6 + $0xbc] sm:$0xf]
    %v1118 = vld [vmem:[%s6] sm:$0x1]
    %v1120 = vperm.slane %v1118, 0
    %v1170 = vunpack.c.l.b16 %v1070
    %v1171 = vunpack.c.l.b16 %v1071
    %v1172 = vunpack.c.l.b16 %v1072
    %v1173 = vunpack.c.l.b16 %v1073
    %v1174 = vunpack.c.l.b16 %v1074
    %v1175 = vunpack.c.l.b16 %v1075
    %v1176 = vunpack.c.l.b16 %v1076
    %v1177 = vunpack.c.l.b16 %v1077
    %v1178 = vunpack.c.l.b16 %v1078
    %v1179 = vunpack.c.l.b16 %v1079
    %v1180 = vunpack.c.l.b16 %v1080
    %v1181 = vunpack.c.l.b16 %v1081
    %v1182 = vunpack.c.l.b16 %v1082
    %v1183 = vunpack.c.l.b16 %v1083
    %v1184 = vunpack.c.l.b16 %v1084
    %v1185 = vunpack.c.l.b16 %v1085
    %v1186 = vunpack.c.l.b16 %v1086
    %v1187 = vunpack.c.l.b16 %v1087
    %v1188 = vunpack.c.l.b16 %v1088
    %v1189 = vunpack.c.l.b16 %v1089
    %v1190 = vunpack.c.l.b16 %v1090
    %v1191 = vunpack.c.l.b16 %v1091
    %v1192 = vunpack.c.l.b16 %v1092
    %v1193 = vunpack.c.l.b16 %v1093
    %v1194 = vunpack.c.l.b16 %v1094
    %v1195 = vunpack.c.l.b16 %v1095
    %v1196 = vunpack.c.l.b16 %v1096
    %v1197 = vunpack.c.l.b16 %v1097
    %v1198 = vunpack.c.l.b16 %v1098
    %v1199 = vunpack.c.l.b16 %v1099
    %v1200 = vunpack.c.l.b16 %v1100
    %v1201 = vunpack.c.l.b16 %v1101
    %v1202 = vunpack.c.l.b16 %v1102
    %v1203 = vunpack.c.l.b16 %v1103
    %v1204 = vunpack.c.l.b16 %v1104
    %v1205 = vunpack.c.l.b16 %v1105
    %v1206 = vunpack.c.l.b16 %v1106
    %v1207 = vunpack.c.l.b16 %v1107
    %v1208 = vunpack.c.l.b16 %v1108
    %v1209 = vunpack.c.l.b16 %v1109
    %v1210 = vunpack.c.l.b16 %v1110
    %v1211 = vunpack.c.l.b16 %v1111
    %v1212 = vunpack.c.l.b16 %v1112
    %v1213 = vunpack.c.l.b16 %v1113
    %v1214 = vunpack.c.l.b16 %v1114
    %v1215 = vunpack.c.l.b16 %v1115
    %v1216 = vunpack.c.l.b16 %v1116
    %v1217 = vunpack.c.l.b16 %v1117
    %v1218 = vpack.c.b16 %v1171, %v1170
    %v1219 = vpack.c.b16 %v1173, %v1172
    %v1220 = vpack.c.b16 %v1175, %v1174
    %v1221 = vpack.c.b16 %v1177, %v1176
    %v1222 = vpack.c.b16 %v1179, %v1178
    %v1223 = vpack.c.b16 %v1181, %v1180
    %v1224 = vpack.c.b16 %v1183, %v1182
    %v1225 = vpack.c.b16 %v1185, %v1184
    %v1226 = vpack.c.b16 %v1187, %v1186
    %v1227 = vpack.c.b16 %v1189, %v1188
    %v1228 = vpack.c.b16 %v1191, %v1190
    %v1229 = vpack.c.b16 %v1193, %v1192
    %v1230 = vpack.c.b16 %v1195, %v1194
    %v1231 = vpack.c.b16 %v1197, %v1196
    %v1232 = vpack.c.b16 %v1199, %v1198
    %v1233 = vpack.c.b16 %v1201, %v1200
    %v1234 = vpack.c.b16 %v1203, %v1202
    %v1235 = vpack.c.b16 %v1205, %v1204
    %v1236 = vpack.c.b16 %v1207, %v1206
    %v1237 = vpack.c.b16 %v1209, %v1208
    %v1238 = vpack.c.b16 %v1211, %v1210
    %v1239 = vpack.c.b16 %v1213, %v1212
    %v1240 = vpack.c.b16 %v1215, %v1214
    %v1241 = vpack.c.b16 %v1217, %v1216
    %1266 = vmatpush.bf16.msra.mxu0 %v1225
    %1267 = vmatpush.bf16.msra.mxu0 %v1224
    %1268 = vmatpush.bf16.msra.mxu0 %v1223
    %1269 = vmatpush.bf16.msra.mxu0 %v1222
    %1270 = vmatpush.bf16.msra.mxu0 %v1221
    %1271 = vmatpush.bf16.msra.mxu0 %v1220
    %1272 = vmatpush.bf16.msra.mxu0 %v1219
    %1273 = vmatpush.bf16.msra.mxu0 %v1218
    %1274 = vmatmul.bf16.gmra.mxu0 %v1067
    %v1275 = vpop.f32.mrf.mxu0
    %v1276 = vadd.f32 %v1120, %v1275
    %v1277 = vpop.f32.mrf.mxu0
    %1278 = vdwg.mxu0
    %1279 = vmatpush.bf16.msra.mxu0 %v1233
    %1280 = vmatpush.bf16.msra.mxu0 %v1232
    %1281 = vmatpush.bf16.msra.mxu0 %v1231
    %1282 = vmatpush.bf16.msra.mxu0 %v1230
    %1283 = vmatpush.bf16.msra.mxu0 %v1229
    %1284 = vmatpush.bf16.msra.mxu0 %v1228
    %1285 = vmatpush.bf16.msra.mxu0 %v1227
    %1286 = vmatpush.bf16.msra.mxu0 %v1226
    %1287 = vmatmul.bf16.gmra.mxu0 %v1068
    %v1288 = vpop.f32.mrf.mxu0
    %v1289 = vadd.f32 %v1276, %v1288
    %v1290 = vpop.f32.mrf.mxu0
    %1291 = vdwg.mxu0
    %1292 = vmatpush.bf16.msra.mxu0 %v1241
    %1293 = vmatpush.bf16.msra.mxu0 %v1240
    %1294 = vmatpush.bf16.msra.mxu0 %v1239
    %1295 = vmatpush.bf16.msra.mxu0 %v1238
    %1296 = vmatpush.bf16.msra.mxu0 %v1237
    %1297 = vmatpush.bf16.msra.mxu0 %v1236
    %1298 = vmatpush.bf16.msra.mxu0 %v1235
    %1299 = vmatpush.bf16.msra.mxu0 %v1234
    %1300 = vmatmul.bf16.gmra.mxu0 %v1069
    %v1301 = vpop.f32.mrf.mxu0
    %v1302 = vadd.f32 %v1289, %v1301
    %v1303 = vpop.f32.mrf.mxu0
    %1304 = vdwg.mxu0
    %1305 = vmax.xlane.f32.xlu0 %v1302
    %v1306 = vpop.xlane.xlu0 %1305
    %v1307 = vsub.f32 %v1302, %v1306
    %v1308 = vmul.f32 %v1307, 1.442695
    %v1309 = vpow.pop %v1308
    %1310 = vadd.xlane.f32.xlu0 %v1309
    %v1311 = vpop.xlane.xlu0 %1310
    %v1312 = vrcp.pop %v1311
    %v1313 = vmul.f32 %v1311, %v1312
    %v1314 = vsub.f32 1.0, %v1313
    %v1315 = vmul.f32 %v1312, %v1314
    %v1316 = vadd.f32 %v1312, %v1315
    %vm1317 = vweird.f32 %v1311
    %vm1318 = vweird.f32 %v1312
    %vm1319 = vmor %vm1317, %vm1318
    %v1320 = vsel %vm1319, %v1312, %v1316
    %v1321 = vand.u32 2147483647, %v1311
    %vm1322 = vcmp.eq.f32.partialorder %v1321, 8.507059e+37
    %v1323 = vand.u32 %v1311, 2147483648
    %v1324 = vor.u32 1.1754944e-38, %v1323
    %v1325 = vsel %vm1322, %v1324, %v1320
    %v1326 = vmul.f32 %v1309, %v1325
    %1327 = vst [vmem:[%s7] sm:$0xff] %v1326
    // Predicated region
    $region42: #{_actor_forward_impl.1} parent=1 // pred_check
      _
    $region43: #{_actor_forward_impl.1} parent=1 // pred_check_branch
      %1329 = sbr.rel (0) target = $region45
    $region44: #{_actor_forward_impl.1} parent=1 // pred_region
      _
    $region45: #{_actor_forward_impl.1} parent=1 // pred_fallthru
      _
    // Predicated region
    $region46: #{_actor_forward_impl.1} parent=1 // pred_check
      _
    $region47: #{_actor_forward_impl.1} parent=1 // pred_check_branch
      %1331 = sbr.rel (0) target = $region49
    $region48: #{_actor_forward_impl.1} parent=1 // pred_region
      _
    $region49: #{_actor_forward_impl.1} parent=1 // pred_fallthru
      _
    %1332 = vsyncpa [#allocation3], 1
    %1333 = vsyncpa [#allocation5], 1

// kernel: _actor_forward_impl.1
$region0: #{_actor_forward_impl.1}
  #allocation0 [shape = 'u32[]', space=smem, size = 0x4, offset = 0x4, fixed_abs, tag = 'smem constant byte address 0x4 - core index']
  #allocation1 [shape = 'u32[72,128]{1,0:T(1,128)}', space=vmem, size = 0x9000, scoped, tag = 'internal scratch']
  %s0 = inlined_call_operand.vmem [shape: f32[8,16], index: 0, kind: input, shape index: {}]
  %s1 = inlined_call_operand.hbm [shape: bf16[16,512], index: 1, kind: input, shape index: {}]
  %s2 = inlined_call_operand.vmem [shape: f32[1,512], index: 2, kind: input, shape index: {}]
  %s3 = inlined_call_operand.hbm [shape: bf16[512,384], index: 3, kind: input, shape index: {}]
  %s4 = inlined_call_operand.vmem [shape: f32[1,384], index: 4, kind: input, shape index: {}]
  %s5 = inlined_call_operand.hbm [shape: bf16[384,128], index: 5, kind: input, shape index: {}]
  %s6 = inlined_call_operand.vmem [shape: f32[1,128], index: 6, kind: input, shape index: {}]
  %s7 = inlined_call_operand.vmem [shape: f32[8,128], index: 7, kind: output, shape index: {}]
  %s8 = sld [smem:[#allocation0]]
  $region50: #{_actor_forward_impl.1} parent=0
    _
  %s10 = ssub.s32 1, %s8
  %s11 = scalar_select 0, %s10, %s8
  $region1: #{_actor_forward_impl.1} parent=0
    #allocation2 [shape = 'u8[16384]{0}', space=vmem, size = 0x4000, scoped, tag = 'input window, operand 1, single buffered']
    #allocation3 [shape = 's32[1]{0}', space=sflag, size = 0x4, scoped, tag = 'scoped memory for _actor_forward_impl.1']
    #allocation4 [shape = 'u8[393216]{0}', space=vmem, size = 0x60000, scoped, tag = 'input window, operand 3, single buffered']
    #allocation5 [shape = 's32[1]{0}', space=sflag, size = 0x4, scoped, tag = 'scoped memory for _actor_forward_impl.1']
    #allocation6 [shape = 'u8[98304]{0}', space=vmem, size = 0x18000, scoped, tag = 'input window, operand 5, single buffered']
    %12 = vsyncpa [#allocation3], 0
    %13 = vsyncpa [#allocation5], 0
    // Predicated region
    $region2: #{_actor_forward_impl.1} parent=1 // pred_check
      _
    $region3: #{_actor_forward_impl.1} parent=1 // pred_check_branch
      %15 = sbr.rel (0) target = $region5
    $region4: #{_actor_forward_impl.1} parent=1 // pred_region
      _
    $region5: #{_actor_forward_impl.1} parent=1 // pred_fallthru
      _
    // Predicated region
    $region6: #{_actor_forward_impl.1} parent=1 // pred_check
      _
    $region7: #{_actor_forward_impl.1} parent=1 // pred_check_branch
      %17 = sbr.rel (0) target = $region9
    $region8: #{_actor_forward_impl.1} parent=1 // pred_region
      %19 = vsyncadd [#allocation3], 0
      %s20 = sshll.u32 %s1, 4
      %s21 = int_to_ptr.hbm [resolvable:$true] %s20
      %s22 = sshll.u32 [#allocation2], 4
      %s23 = int_to_ptr.vmem [resolvable:$true] %s22
      %28 = dma.hbm_to_vmem [thread:$0]  %s21, 512, %s23, [#allocation3], 256, 256, 16
    $region9: #{_actor_forward_impl.1} parent=1 // pred_fallthru
      _
    // Predicated region
    $region10: #{_actor_forward_impl.1} parent=1 // pred_check
      _
    $region11: #{_actor_forward_impl.1} parent=1 // pred_check_branch
      %30 = sbr.rel (0) target = $region13
    $region12: #{_actor_forward_impl.1} parent=1 // pred_region
      _
    $region13: #{_actor_forward_impl.1} parent=1 // pred_fallthru
      _
    // Predicated region
    $region14: #{_actor_forward_impl.1} parent=1 // pred_check
      _
    $region15: #{_actor_forward_impl.1} parent=1 // pred_check_branch
      %32 = sbr.rel (0) target = $region17
    $region16: #{_actor_forward_impl.1} parent=1 // pred_region
      %34 = vsyncadd [#allocation5], 0
      %s35 = sshll.u32 %s3, 4
      %s36 = int_to_ptr.hbm [resolvable:$true] %s35
      %s37 = sshll.u32 [#allocation4], 4
      %s38 = int_to_ptr.vmem [resolvable:$true] %s37
      %43 = dma.hbm_to_vmem [thread:$0]  %s36, 12288, %s38, [#allocation5], 192, 192, 12
    $region17: #{_actor_forward_impl.1} parent=1 // pred_fallthru
      _
    // Predicated region
    $region18: #{_actor_forward_impl.1} parent=1 // pred_check
      _
    $region19: #{_actor_forward_impl.1} parent=1 // pred_check_branch
      %45 = sbr.rel (0) target = $region21
    $region20: #{_actor_forward_impl.1} parent=1 // pred_region
      _
    $region21: #{_actor_forward_impl.1} parent=1 // pred_fallthru
      _
    // Predicated region
    $region22: #{_actor_forward_impl.1} parent=1 // pred_check
      _
    $region23: #{_actor_forward_impl.1} parent=1 // pred_check_branch
      %47 = sbr.rel (0) target = $region25
    $region24: #{_actor_forward_impl.1} parent=1 // pred_region
      %49 = vsyncadd [#allocation5], 0
      %s50 = sshll.u32 %s5, 4
      %s51 = int_to_ptr.hbm [resolvable:$true] %s50
      %s52 = sshll.u32 [#allocation6], 4
      %s53 = int_to_ptr.vmem [resolvable:$true] %s52
      %58 = dma.hbm_to_vmem [thread:$0]  %s51, 3072, %s53, [#allocation5], 64, 64, 4
    $region25: #{_actor_forward_impl.1} parent=1 // pred_fallthru
      _
    // Predicated region
    $region26: #{_actor_forward_impl.1} parent=1 // pred_check
      _
    $region27: #{_actor_forward_impl.1} parent=1 // pred_check_branch
      %60 = sbr.rel (0) target = $region29
    $region28: #{_actor_forward_impl.1} parent=1 // pred_region
      _
    $region29: #{_actor_forward_impl.1} parent=1 // pred_fallthru
      _
    // Predicated region
    $region30: #{_actor_forward_impl.1} parent=1 // pred_check
      _
    $region31: #{_actor_forward_impl.1} parent=1 // pred_check_branch
      %62 = sbr.rel (0) target = $region33
    $region32: #{_actor_forward_impl.1} parent=1 // pred_region
      %64 = dma.done [#allocation3], 512
    $region33: #{_actor_forward_impl.1} parent=1 // pred_fallthru
      _
    // Predicated region
    $region34: #{_actor_forward_impl.1} parent=1 // pred_check
      _
    $region35: #{_actor_forward_impl.1} parent=1 // pred_check_branch
      %66 = sbr.rel (0) target = $region37
    $region36: #{_actor_forward_impl.1} parent=1 // pred_region
      %68 = dma.done [#allocation5], 12288
    $region37: #{_actor_forward_impl.1} parent=1 // pred_fallthru
      _
    // Predicated region
    $region38: #{_actor_forward_impl.1} parent=1 // pred_check
      _
    $region39: #{_actor_forward_impl.1} parent=1 // pred_check_branch
      %70 = sbr.rel (0) target = $region41
    $region40: #{_actor_forward_impl.1} parent=1 // pred_region
      %72 = dma.done [#allocation5], 3072
    $region41: #{_actor_forward_impl.1} parent=1 // pred_fallthru
      _
    %v74 = vld [vmem:[%s0] sm:$0xff]
    %v75 = vpack.c.bf16 %v74, %v74
    %v76 = vld [vmem:[#allocation2] sm:$0xff]
    %v77 = vld [vmem:[#allocation2 + $0x8] sm:$0xff]
    %v78 = vld [vmem:[#allocation2 + $0x10] sm:$0xff]
    %v79 = vld [vmem:[#allocation2 + $0x18] sm:$0xff]
    %v84 = vunpack.c.l.b16 %v76
    %v85 = vunpack.c.h.b16 %v76
    %v86 = vunpack.c.l.b16 %v77
    %v87 = vunpack.c.h.b16 %v77
    %v88 = vunpack.c.l.b16 %v78
    %v89 = vunpack.c.h.b16 %v78
    %v90 = vunpack.c.l.b16 %v79
    %v91 = vunpack.c.h.b16 %v79
    %v92 = vpack.c.b16 %v88, %v84
    %v93 = vpack.c.b16 %v89, %v85
    %v94 = vpack.c.b16 %v90, %v86
    %v95 = vpack.c.b16 %v91, %v87
    %vm100 = vcmask 130048
    %v102 = vsel %vm100, %v75, 0
    %104 = vmatpush.bf16.msra.mxu0 0
    %105 = vmatpush.bf16.msra.mxu0 0
    %106 = vmatpush.bf16.msra.mxu0 0
    %107 = vmatpush.bf16.msra.mxu0 0
    %108 = vmatpush.bf16.msra.mxu0 0
    %109 = vmatpush.bf16.msra.mxu0 0
    %110 = vmatpush.bf16.msra.mxu0 0
    %111 = vmatpush.bf16.msra.mxu0 %v92
    %112 = vmatmul.bf16.gmra.mxu0 %v102
    %v113 = vpop.f32.mrf.mxu0
    %v114 = vadd.f32 0.0, %v113
    %v115 = vpop.f32.mrf.mxu0
    %116 = vdwg.mxu0
    %117 = vmatpush.bf16.msra.mxu0 0
    %118 = vmatpush.bf16.msra.mxu0 0
    %119 = vmatpush.bf16.msra.mxu0 0
    %120 = vmatpush.bf16.msra.mxu0 0
    %121 = vmatpush.bf16.msra.mxu0 0
    %122 = vmatpush.bf16.msra.mxu0 0
    %123 = vmatpush.bf16.msra.mxu0 0
    %124 = vmatpush.bf16.msra.mxu0 %v93
    %125 = vmatmul.bf16.gmra.mxu0 %v102
    %v126 = vpop.f32.mrf.mxu0
    %v127 = vadd.f32 0.0, %v126
    %v128 = vpop.f32.mrf.mxu0
    %129 = vdwg.mxu0
    %130 = vmatpush.bf16.msra.mxu0 0
    %131 = vmatpush.bf16.msra.mxu0 0
    %132 = vmatpush.bf16.msra.mxu0 0
    %133 = vmatpush.bf16.msra.mxu0 0
    %134 = vmatpush.bf16.msra.mxu0 0
    %135 = vmatpush.bf16.msra.mxu0 0
    %136 = vmatpush.bf16.msra.mxu0 0
    %137 = vmatpush.bf16.msra.mxu0 %v94
    %138 = vmatmul.bf16.gmra.mxu0 %v102
    %v139 = vpop.f32.mrf.mxu0
    %v140 = vadd.f32 0.0, %v139
    %v141 = vpop.f32.mrf.mxu0
    %142 = vdwg.mxu0
    %143 = vmatpush.bf16.msra.mxu0 0
    %144 = vmatpush.bf16.msra.mxu0 0
    %145 = vmatpush.bf16.msra.mxu0 0
    %146 = vmatpush.bf16.msra.mxu0 0
    %147 = vmatpush.bf16.msra.mxu0 0
    %148 = vmatpush.bf16.msra.mxu0 0
    %149 = vmatpush.bf16.msra.mxu0 0
    %150 = vmatpush.bf16.msra.mxu0 %v95
    %151 = vmatmul.bf16.gmra.mxu0 %v102
    %v152 = vpop.f32.mrf.mxu0
    %v153 = vadd.f32 0.0, %v152
    %v154 = vpop.f32.mrf.mxu0
    %155 = vdwg.mxu0
    %v156 = vpack.c.bf16 %v127, %v114
    %v157 = vpack.c.bf16 %v153, %v140
    %v158 = vld [vmem:[%s2] sm:$0xf]
    %v160 = vperm.slane %v158, 0
    %v161 = vperm.slane %v158, 1
    %v162 = vperm.slane %v158, 2
    %v163 = vperm.slane %v158, 3
    %v168 = vpack.c.bf16 %v161, %v160
    %v169 = vpack.c.bf16 %v163, %v162
    %v172 = vunpack.c.l.b16 %v168
    %v173 = vunpack.c.h.b16 %v168
    %v174 = vunpack.c.l.b16 %v169
    %v175 = vunpack.c.h.b16 %v169
    %v176 = vpack.c.b16 %v172, %v172
    %v177 = vpack.c.b16 %v173, %v173
    %v178 = vpack.c.b16 %v174, %v174
    %v179 = vpack.c.b16 %v175, %v175
    %v181 = vpack.i.b16 %v176, %v176
    %v183 = vperm.slane %v181, 0
    %v185 = vpack.i.b16 %v177, %v177
    %v187 = vperm.slane %v185, 0
    %v189 = vpack.i.b16 %v178, %v178
    %v191 = vperm.slane %v189, 0
    %v193 = vpack.i.b16 %v179, %v179
    %v195 = vperm.slane %v193, 0
    %v196 = vunpack.c.l.bf16 %v156
    %v197 = vunpack.c.h.bf16 %v156
    %v198 = vunpack.c.l.bf16 %v157
    %v199 = vunpack.c.h.bf16 %v157
    %v200 = vunpack.c.l.bf16 %v183
    %v201 = vunpack.c.l.bf16 %v187
    %v202 = vunpack.c.l.bf16 %v191
    %v203 = vunpack.c.l.bf16 %v195
    %v204 = vadd.f32 %v196, %v200
    %v205 = vadd.f32 %v197, %v201
    %v206 = vadd.f32 %v198, %v202
    %v207 = vadd.f32 %v199, %v203
    %v208 = vpack.c.bf16 %v205, %v204
    %v209 = vpack.c.bf16 %v207, %v206
    %v210 = vunpack.c.l.bf16 %v208
    %v211 = vunpack.c.h.bf16 %v208
    %v212 = vunpack.c.l.bf16 %v209
    %v213 = vunpack.c.h.bf16 %v209
    %v214 = vmax.f32 %v210, 0.0
    %v215 = vmax.f32 %v211, 0.0
    %v216 = vmax.f32 %v212, 0.0
    %v217 = vmax.f32 %v213, 0.0
    %v218 = vpack.c.bf16 %v214, %v214
    %v219 = vpack.c.bf16 %v215, %v215
    %v220 = vpack.c.bf16 %v216, %v216
    %v221 = vpack.c.bf16 %v217, %v217
    %v222 = vld [vmem:[#allocation4] sm:$0xff]
    %v223 = vld [vmem:[#allocation4 + $0x8] sm:$0xf]
    %v224 = vld [vmem:[#allocation4 + $0xc] sm:$0xff]
    %v225 = vld [vmem:[#allocation4 + $0x14] sm:$0xf]
    %v226 = vld [vmem:[#allocation4 + $0x18] sm:$0xff]
    %v227 = vld [vmem:[#allocation4 + $0x20] sm:$0xf]
    %v228 = vld [vmem:[#allocation4 + $0x24] sm:$0xff]
    %v229 = vld [vmem:[#allocation4 + $0x2c] sm:$0xf]
    %v230 = vld [vmem:[#allocation4 + $0x30] sm:$0xff]
    %v231 = vld [vmem:[#allocation4 + $0x38] sm:$0xf]
    %v232 = vld [vmem:[#allocation4 + $0x3c] sm:$0xff]
    %v233 = vld [vmem:[#allocation4 + $0x44] sm:$0xf]
    %v234 = vld [vmem:[#allocation4 + $0x48] sm:$0xff]
    %v235 = vld [vmem:[#allocation4 + $0x50] sm:$0xf]
    %v236 = vld [vmem:[#allocation4 + $0x54] sm:$0xff]
    %v237 = vld [vmem:[#allocation4 + $0x5c] sm:$0xf]
    %v238 = vld [vmem:[#allocation4 + $0x60] sm:$0xff]
    %v239 = vld [vmem:[#allocation4 + $0x68] sm:$0xf]
    %v240 = vld [vmem:[#allocation4 + $0x6c] sm:$0xff]
    %v241 = vld [vmem:[#allocation4 + $0x74] sm:$0xf]
    %v242 = vld [vmem:[#allocation4 + $0x78] sm:$0xff]
    %v243 = vld [vmem:[#allocation4 + $0x80] sm:$0xf]
    %v244 = vld [vmem:[#allocation4 + $0x84] sm:$0xff]
    %v245 = vld [vmem:[#allocation4 + $0x8c] sm:$0xf]
    %v246 = vld [vmem:[#allocation4 + $0x90] sm:$0xff]
    %v247 = vld [vmem:[#allocation4 + $0x98] sm:$0xf]
    %v248 = vld [vmem:[#allocation4 + $0x9c] sm:$0xff]
    %v249 = vld [vmem:[#allocation4 + $0xa4] sm:$0xf]
    %v250 = vld [vmem:[#allocation4 + $0xa8] sm:$0xff]
    %v251 = vld [vmem:[#allocation4 + $0xb0] sm:$0xf]
    %v252 = vld [vmem:[#allocation4 + $0xb4] sm:$0xff]
    %v253 = vld [vmem:[#allocation4 + $0xbc] sm:$0xf]
    %v254 = vld [vmem:[#allocation4 + $0xc0] sm:$0xff]
    %v255 = vld [vmem:[#allocation4 + $0xc8] sm:$0xf]
    %v256 = vld [vmem:[#allocation4 + $0xcc] sm:$0xff]
    %v257 = vld [vmem:[#allocation4 + $0xd4] sm:$0xf]
    %v258 = vld [vmem:[#allocation4 + $0xd8] sm:$0xff]
    %v259 = vld [vmem:[#allocation4 + $0xe0] sm:$0xf]
    %v260 = vld [vmem:[#allocation4 + $0xe4] sm:$0xff]
    %v261 = vld [vmem:[#allocation4 + $0xec] sm:$0xf]
    %v262 = vld [vmem:[#allocation4 + $0xf0] sm:$0xff]
    %v263 = vld [vmem:[#allocation4 + $0xf8] sm:$0xf]
    %v264 = vld [vmem:[#allocation4 + $0xfc] sm:$0xff]
    %v265 = vld [vmem:[#allocation4 + $0x104] sm:$0xf]
    %v266 = vld [vmem:[#allocation4 + $0x108] sm:$0xff]
    %v267 = vld [vmem:[#allocation4 + $0x110] sm:$0xf]
    %v268 = vld [vmem:[#allocation4 + $0x114] sm:$0xff]
    %v269 = vld [vmem:[#allocation4 + $0x11c] sm:$0xf]
    %v270 = vld [vmem:[#allocation4 + $0x120] sm:$0xff]
    %v271 = vld [vmem:[#allocation4 + $0x128] sm:$0xf]
    %v272 = vld [vmem:[#allocation4 + $0x12c] sm:$0xff]
    %v273 = vld [vmem:[#allocation4 + $0x134] sm:$0xf]
    %v274 = vld [vmem:[#allocation4 + $0x138] sm:$0xff]
    %v275 = vld [vmem:[#allocation4 + $0x140] sm:$0xf]
    %v276 = vld [vmem:[#allocation4 + $0x144] sm:$0xff]
    %v277 = vld [vmem:[#allocation4 + $0x14c] sm:$0xf]
    %v278 = vld [vmem:[#allocation4 + $0x150] sm:$0xff]
    %v279 = vld [vmem:[#allocation4 + $0x158] sm:$0xf]
    %v280 = vld [vmem:[#allocation4 + $0x15c] sm:$0xff]
    %v281 = vld [vmem:[#allocation4 + $0x164] sm:$0xf]
    %v282 = vld [vmem:[#allocation4 + $0x168] sm:$0xff]
    %v283 = vld [vmem:[#allocation4 + $0x170] sm:$0xf]
    %v284 = vld [vmem:[#allocation4 + $0x174] sm:$0xff]
    %v285 = vld [vmem:[#allocation4 + $0x17c] sm:$0xf]
    %v286 = vld [vmem:[#allocation4 + $0x180] sm:$0xff]
    %v287 = vld [vmem:[#allocation4 + $0x188] sm:$0xf]
    %v288 = vld [vmem:[#allocation4 + $0x18c] sm:$0xff]
    %v289 = vld [vmem:[#allocation4 + $0x194] sm:$0xf]
    %v290 = vld [vmem:[#allocation4 + $0x198] sm:$0xff]
    %v291 = vld [vmem:[#allocation4 + $0x1a0] sm:$0xf]
    %v292 = vld [vmem:[#allocation4 + $0x1a4] sm:$0xff]
    %v293 = vld [vmem:[#allocation4 + $0x1ac] sm:$0xf]
    %v294 = vld [vmem:[#allocation4 + $0x1b0] sm:$0xff]
    %v295 = vld [vmem:[#allocation4 + $0x1b8] sm:$0xf]
    %v296 = vld [vmem:[#allocation4 + $0x1bc] sm:$0xff]
    %v297 = vld [vmem:[#allocation4 + $0x1c4] sm:$0xf]
    %v298 = vld [vmem:[#allocation4 + $0x1c8] sm:$0xff]
    %v299 = vld [vmem:[#allocation4 + $0x1d0] sm:$0xf]
    %v300 = vld [vmem:[#allocation4 + $0x1d4] sm:$0xff]
    %v301 = vld [vmem:[#allocation4 + $0x1dc] sm:$0xf]
    %v302 = vld [vmem:[#allocation4 + $0x1e0] sm:$0xff]
    %v303 = vld [vmem:[#allocation4 + $0x1e8] sm:$0xf]
    %v304 = vld [vmem:[#allocation4 + $0x1ec] sm:$0xff]
    %v305 = vld [vmem:[#allocation4 + $0x1f4] sm:$0xf]
    %v306 = vld [vmem:[#allocation4 + $0x1f8] sm:$0xff]
    %v307 = vld [vmem:[#allocation4 + $0x200] sm:$0xf]
    %v308 = vld [vmem:[#allocation4 + $0x204] sm:$0xff]
    %v309 = vld [vmem:[#allocation4 + $0x20c] sm:$0xf]
    %v310 = vld [vmem:[#allocation4 + $0x210] sm:$0xff]
    %v311 = vld [vmem:[#allocation4 + $0x218] sm:$0xf]
    %v312 = vld [vmem:[#allocation4 + $0x21c] sm:$0xff]
    %v313 = vld [vmem:[#allocation4 + $0x224] sm:$0xf]
    %v314 = vld [vmem:[#allocation4 + $0x228] sm:$0xff]
    %v315 = vld [vmem:[#allocation4 + $0x230] sm:$0xf]
    %v316 = vld [vmem:[#allocation4 + $0x234] sm:$0xff]
    %v317 = vld [vmem:[#allocation4 + $0x23c] sm:$0xf]
    %v318 = vld [vmem:[#allocation4 + $0x240] sm:$0xff]
    %v319 = vld [vmem:[#allocation4 + $0x248] sm:$0xf]
    %v320 = vld [vmem:[#allocation4 + $0x24c] sm:$0xff]
    %v321 = vld [vmem:[#allocation4 + $0x254] sm:$0xf]
    %v322 = vld [vmem:[#allocation4 + $0x258] sm:$0xff]
    %v323 = vld [vmem:[#allocation4 + $0x260] sm:$0xf]
    %v324 = vld [vmem:[#allocation4 + $0x264] sm:$0xff]
    %v325 = vld [vmem:[#allocation4 + $0x26c] sm:$0xf]
    %v326 = vld [vmem:[#allocation4 + $0x270] sm:$0xff]
    %v327 = vld [vmem:[#allocation4 + $0x278] sm:$0xf]
    %v328 = vld [vmem:[#allocation4 + $0x27c] sm:$0xff]
    %v329 = vld [vmem:[#allocation4 + $0x284] sm:$0xf]
    %v330 = vld [vmem:[#allocation4 + $0x288] sm:$0xff]
    %v331 = vld [vmem:[#allocation4 + $0x290] sm:$0xf]
    %v332 = vld [vmem:[#allocation4 + $0x294] sm:$0xff]
    %v333 = vld [vmem:[#allocation4 + $0x29c] sm:$0xf]
    %v334 = vld [vmem:[#allocation4 + $0x2a0] sm:$0xff]
    %v335 = vld [vmem:[#allocation4 + $0x2a8] sm:$0xf]
    %v336 = vld [vmem:[#allocation4 + $0x2ac] sm:$0xff]
    %v337 = vld [vmem:[#allocation4 + $0x2b4] sm:$0xf]
    %v338 = vld [vmem:[#allocation4 + $0x2b8] sm:$0xff]
    %v339 = vld [vmem:[#allocation4 + $0x2c0] sm:$0xf]
    %v340 = vld [vmem:[#allocation4 + $0x2c4] sm:$0xff]
    %v341 = vld [vmem:[#allocation4 + $0x2cc] sm:$0xf]
    %v342 = vld [vmem:[#allocation4 + $0x2d0] sm:$0xff]
    %v343 = vld [vmem:[#allocation4 + $0x2d8] sm:$0xf]
    %v344 = vld [vmem:[#allocation4 + $0x2dc] sm:$0xff]
    %v345 = vld [vmem:[#allocation4 + $0x2e4] sm:$0xf]
    %v346 = vld [vmem:[#allocation4 + $0x2e8] sm:$0xff]
    %v347 = vld [vmem:[#allocation4 + $0x2f0] sm:$0xf]
    %v348 = vld [vmem:[#allocation4 + $0x2f4] sm:$0xff]
    %v349 = vld [vmem:[#allocation4 + $0x2fc] sm:$0xf]
    %v478 = vunpack.c.l.b16 %v222
    %v479 = vunpack.c.h.b16 %v222
    %v480 = vunpack.c.l.b16 %v223
    %v481 = vunpack.c.l.b16 %v224
    %v482 = vunpack.c.h.b16 %v224
    %v483 = vunpack.c.l.b16 %v225
    %v484 = vunpack.c.l.b16 %v226
    %v485 = vunpack.c.h.b16 %v226
    %v486 = vunpack.c.l.b16 %v227
    %v487 = vunpack.c.l.b16 %v228
    %v488 = vunpack.c.h.b16 %v228
    %v489 = vunpack.c.l.b16 %v229
    %v490 = vunpack.c.l.b16 %v230
    %v491 = vunpack.c.h.b16 %v230
    %v492 = vunpack.c.l.b16 %v231
    %v493 = vunpack.c.l.b16 %v232
    %v494 = vunpack.c.h.b16 %v232
    %v495 = vunpack.c.l.b16 %v233
    %v496 = vunpack.c.l.b16 %v234
    %v497 = vunpack.c.h.b16 %v234
    %v498 = vunpack.c.l.b16 %v235
    %v499 = vunpack.c.l.b16 %v236
    %v500 = vunpack.c.h.b16 %v236
    %v501 = vunpack.c.l.b16 %v237
    %v502 = vunpack.c.l.b16 %v238
    %v503 = vunpack.c.h.b16 %v238
    %v504 = vunpack.c.l.b16 %v239
    %v505 = vunpack.c.l.b16 %v240
    %v506 = vunpack.c.h.b16 %v240
    %v507 = vunpack.c.l.b16 %v241
    %v508 = vunpack.c.l.b16 %v242
    %v509 = vunpack.c.h.b16 %v242
    %v510 = vunpack.c.l.b16 %v243
    %v511 = vunpack.c.l.b16 %v244
    %v512 = vunpack.c.h.b16 %v244
    %v513 = vunpack.c.l.b16 %v245
    %v514 = vunpack.c.l.b16 %v246
    %v515 = vunpack.c.h.b16 %v246
    %v516 = vunpack.c.l.b16 %v247
    %v517 = vunpack.c.l.b16 %v248
    %v518 = vunpack.c.h.b16 %v248
    %v519 = vunpack.c.l.b16 %v249
    %v520 = vunpack.c.l.b16 %v250
    %v521 = vunpack.c.h.b16 %v250
    %v522 = vunpack.c.l.b16 %v251
    %v523 = vunpack.c.l.b16 %v252
    %v524 = vunpack.c.h.b16 %v252
    %v525 = vunpack.c.l.b16 %v253
    %v526 = vunpack.c.l.b16 %v254
    %v527 = vunpack.c.h.b16 %v254
    %v528 = vunpack.c.l.b16 %v255
    %v529 = vunpack.c.l.b16 %v256
    %v530 = vunpack.c.h.b16 %v256
    %v531 = vunpack.c.l.b16 %v257
    %v532 = vunpack.c.l.b16 %v258
    %v533 = vunpack.c.h.b16 %v258
    %v534 = vunpack.c.l.b16 %v259
    %v535 = vunpack.c.l.b16 %v260
    %v536 = vunpack.c.h.b16 %v260
    %v537 = vunpack.c.l.b16 %v261
    %v538 = vunpack.c.l.b16 %v262
    %v539 = vunpack.c.h.b16 %v262
    %v540 = vunpack.c.l.b16 %v263
    %v541 = vunpack.c.l.b16 %v264
    %v542 = vunpack.c.h.b16 %v264
    %v543 = vunpack.c.l.b16 %v265
    %v544 = vunpack.c.l.b16 %v266
    %v545 = vunpack.c.h.b16 %v266
    %v546 = vunpack.c.l.b16 %v267
    %v547 = vunpack.c.l.b16 %v268
    %v548 = vunpack.c.h.b16 %v268
    %v549 = vunpack.c.l.b16 %v269
    %v550 = vunpack.c.l.b16 %v270
    %v551 = vunpack.c.h.b16 %v270
    %v552 = vunpack.c.l.b16 %v271
    %v553 = vunpack.c.l.b16 %v272
    %v554 = vunpack.c.h.b16 %v272
    %v555 = vunpack.c.l.b16 %v273
    %v556 = vunpack.c.l.b16 %v274
    %v557 = vunpack.c.h.b16 %v274
    %v558 = vunpack.c.l.b16 %v275
    %v559 = vunpack.c.l.b16 %v276
    %v560 = vunpack.c.h.b16 %v276
    %v561 = vunpack.c.l.b16 %v277
    %v562 = vunpack.c.l.b16 %v278
    %v563 = vunpack.c.h.b16 %v278
    %v564 = vunpack.c.l.b16 %v279
    %v565 = vunpack.c.l.b16 %v280
    %v566 = vunpack.c.h.b16 %v280
    %v567 = vunpack.c.l.b16 %v281
    %v568 = vunpack.c.l.b16 %v282
    %v569 = vunpack.c.h.b16 %v282
    %v570 = vunpack.c.l.b16 %v283
    %v571 = vunpack.c.l.b16 %v284
    %v572 = vunpack.c.h.b16 %v284
    %v573 = vunpack.c.l.b16 %v285
    %v574 = vunpack.c.l.b16 %v286
    %v575 = vunpack.c.h.b16 %v286
    %v576 = vunpack.c.l.b16 %v287
    %v577 = vunpack.c.l.b16 %v288
    %v578 = vunpack.c.h.b16 %v288
    %v579 = vunpack.c.l.b16 %v289
    %v580 = vunpack.c.l.b16 %v290
    %v581 = vunpack.c.h.b16 %v290
    %v582 = vunpack.c.l.b16 %v291
    %v583 = vunpack.c.l.b16 %v292
    %v584 = vunpack.c.h.b16 %v292
    %v585 = vunpack.c.l.b16 %v293
    %v586 = vunpack.c.l.b16 %v294
    %v587 = vunpack.c.h.b16 %v294
    %v588 = vunpack.c.l.b16 %v295
    %v589 = vunpack.c.l.b16 %v296
    %v590 = vunpack.c.h.b16 %v296
    %v591 = vunpack.c.l.b16 %v297
    %v592 = vunpack.c.l.b16 %v298
    %v593 = vunpack.c.h.b16 %v298
    %v594 = vunpack.c.l.b16 %v299
    %v595 = vunpack.c.l.b16 %v300
    %v596 = vunpack.c.h.b16 %v300
    %v597 = vunpack.c.l.b16 %v301
    %v598 = vunpack.c.l.b16 %v302
    %v599 = vunpack.c.h.b16 %v302
    %v600 = vunpack.c.l.b16 %v303
    %v601 = vunpack.c.l.b16 %v304
    %v602 = vunpack.c.h.b16 %v304
    %v603 = vunpack.c.l.b16 %v305
    %v604 = vunpack.c.l.b16 %v306
    %v605 = vunpack.c.h.b16 %v306
    %v606 = vunpack.c.l.b16 %v307
    %v607 = vunpack.c.l.b16 %v308
    %v608 = vunpack.c.h.b16 %v308
    %v609 = vunpack.c.l.b16 %v309
    %v610 = vunpack.c.l.b16 %v310
    %v611 = vunpack.c.h.b16 %v310
    %v612 = vunpack.c.l.b16 %v311
    %v613 = vunpack.c.l.b16 %v312
    %v614 = vunpack.c.h.b16 %v312
    %v615 = vunpack.c.l.b16 %v313
    %v616 = vunpack.c.l.b16 %v314
    %v617 = vunpack.c.h.b16 %v314
    %v618 = vunpack.c.l.b16 %v315
    %v619 = vunpack.c.l.b16 %v316
    %v620 = vunpack.c.h.b16 %v316
    %v621 = vunpack.c.l.b16 %v317
    %v622 = vunpack.c.l.b16 %v318
    %v623 = vunpack.c.h.b16 %v318
    %v624 = vunpack.c.l.b16 %v319
    %v625 = vunpack.c.l.b16 %v320
    %v626 = vunpack.c.h.b16 %v320
    %v627 = vunpack.c.l.b16 %v321
    %v628 = vunpack.c.l.b16 %v322
    %v629 = vunpack.c.h.b16 %v322
    %v630 = vunpack.c.l.b16 %v323
    %v631 = vunpack.c.l.b16 %v324
    %v632 = vunpack.c.h.b16 %v324
    %v633 = vunpack.c.l.b16 %v325
    %v634 = vunpack.c.l.b16 %v326
    %v635 = vunpack.c.h.b16 %v326
    %v636 = vunpack.c.l.b16 %v327
    %v637 = vunpack.c.l.b16 %v328
    %v638 = vunpack.c.h.b16 %v328
    %v639 = vunpack.c.l.b16 %v329
    %v640 = vunpack.c.l.b16 %v330
    %v641 = vunpack.c.h.b16 %v330
    %v642 = vunpack.c.l.b16 %v331
    %v643 = vunpack.c.l.b16 %v332
    %v644 = vunpack.c.h.b16 %v332
    %v645 = vunpack.c.l.b16 %v333
    %v646 = vunpack.c.l.b16 %v334
    %v647 = vunpack.c.h.b16 %v334
    %v648 = vunpack.c.l.b16 %v335
    %v649 = vunpack.c.l.b16 %v336
    %v650 = vunpack.c.h.b16 %v336
    %v651 = vunpack.c.l.b16 %v337
    %v652 = vunpack.c.l.b16 %v338
    %v653 = vunpack.c.h.b16 %v338
    %v654 = vunpack.c.l.b16 %v339
    %v655 = vunpack.c.l.b16 %v340
    %v656 = vunpack.c.h.b16 %v340
    %v657 = vunpack.c.l.b16 %v341
    %v658 = vunpack.c.l.b16 %v342
    %v659 = vunpack.c.h.b16 %v342
    %v660 = vunpack.c.l.b16 %v343
    %v661 = vunpack.c.l.b16 %v344
    %v662 = vunpack.c.h.b16 %v344
    %v663 = vunpack.c.l.b16 %v345
    %v664 = vunpack.c.l.b16 %v346
    %v665 = vunpack.c.h.b16 %v346
    %v666 = vunpack.c.l.b16 %v347
    %v667 = vunpack.c.l.b16 %v348
    %v668 = vunpack.c.h.b16 %v348
    %v669 = vunpack.c.l.b16 %v349
    %v670 = vpack.c.b16 %v481, %v478
    %v671 = vpack.c.b16 %v482, %v479
    %v672 = vpack.c.b16 %v483, %v480
    %v673 = vpack.c.b16 %v487, %v484
    %v674 = vpack.c.b16 %v488, %v485
    %v675 = vpack.c.b16 %v489, %v486
    %v676 = vpack.c.b16 %v493, %v490
    %v677 = vpack.c.b16 %v494, %v491
    %v678 = vpack.c.b16 %v495, %v492
    %v679 = vpack.c.b16 %v499, %v496
    %v680 = vpack.c.b16 %v500, %v497
    %v681 = vpack.c.b16 %v501, %v498
    %v682 = vpack.c.b16 %v505, %v502
    %v683 = vpack.c.b16 %v506, %v503
    %v684 = vpack.c.b16 %v507, %v504
    %v685 = vpack.c.b16 %v511, %v508
    %v686 = vpack.c.b16 %v512, %v509
    %v687 = vpack.c.b16 %v513, %v510
    %v688 = vpack.c.b16 %v517, %v514
    %v689 = vpack.c.b16 %v518, %v515
    %v690 = vpack.c.b16 %v519, %v516
    %v691 = vpack.c.b16 %v523, %v520
    %v692 = vpack.c.b16 %v524, %v521
    %v693 = vpack.c.b16 %v525, %v522
    %v694 = vpack.c.b16 %v529, %v526
    %v695 = vpack.c.b16 %v530, %v527
    %v696 = vpack.c.b16 %v531, %v528
    %v697 = vpack.c.b16 %v535, %v532
    %v698 = vpack.c.b16 %v536, %v533
    %v699 = vpack.c.b16 %v537, %v534
    %v700 = vpack.c.b16 %v541, %v538
    %v701 = vpack.c.b16 %v542, %v539
    %v702 = vpack.c.b16 %v543, %v540
    %v703 = vpack.c.b16 %v547, %v544
    %v704 = vpack.c.b16 %v548, %v545
    %v705 = vpack.c.b16 %v549, %v546
    %v706 = vpack.c.b16 %v553, %v550
    %v707 = vpack.c.b16 %v554, %v551
    %v708 = vpack.c.b16 %v555, %v552
    %v709 = vpack.c.b16 %v559, %v556
    %v710 = vpack.c.b16 %v560, %v557
    %v711 = vpack.c.b16 %v561, %v558
    %v712 = vpack.c.b16 %v565, %v562
    %v713 = vpack.c.b16 %v566, %v563
    %v714 = vpack.c.b16 %v567, %v564
    %v715 = vpack.c.b16 %v571, %v568
    %v716 = vpack.c.b16 %v572, %v569
    %v717 = vpack.c.b16 %v573, %v570
    %v718 = vpack.c.b16 %v577, %v574
    %v719 = vpack.c.b16 %v578, %v575
    %v720 = vpack.c.b16 %v579, %v576
    %v721 = vpack.c.b16 %v583, %v580
    %v722 = vpack.c.b16 %v584, %v581
    %v723 = vpack.c.b16 %v585, %v582
    %v724 = vpack.c.b16 %v589, %v586
    %v725 = vpack.c.b16 %v590, %v587
    %v726 = vpack.c.b16 %v591, %v588
    %v727 = vpack.c.b16 %v595, %v592
    %v728 = vpack.c.b16 %v596, %v593
    %v729 = vpack.c.b16 %v597, %v594
    %v730 = vpack.c.b16 %v601, %v598
    %v731 = vpack.c.b16 %v602, %v599
    %v732 = vpack.c.b16 %v603, %v600
    %v733 = vpack.c.b16 %v607, %v604
    %v734 = vpack.c.b16 %v608, %v605
    %v735 = vpack.c.b16 %v609, %v606
    %v736 = vpack.c.b16 %v613, %v610
    %v737 = vpack.c.b16 %v614, %v611
    %v738 = vpack.c.b16 %v615, %v612
    %v739 = vpack.c.b16 %v619, %v616
    %v740 = vpack.c.b16 %v620, %v617
    %v741 = vpack.c.b16 %v621, %v618
    %v742 = vpack.c.b16 %v625, %v622
    %v743 = vpack.c.b16 %v626, %v623
    %v744 = vpack.c.b16 %v627, %v624
    %v745 = vpack.c.b16 %v631, %v628
    %v746 = vpack.c.b16 %v632, %v629
    %v747 = vpack.c.b16 %v633, %v630
    %v748 = vpack.c.b16 %v637, %v634
    %v749 = vpack.c.b16 %v638, %v635
    %v750 = vpack.c.b16 %v639, %v636
    %v751 = vpack.c.b16 %v643, %v640
    %v752 = vpack.c.b16 %v644, %v641
    %v753 = vpack.c.b16 %v645, %v642
    %v754 = vpack.c.b16 %v649, %v646
    %v755 = vpack.c.b16 %v650, %v647
    %v756 = vpack.c.b16 %v651, %v648
    %v757 = vpack.c.b16 %v655, %v652
    %v758 = vpack.c.b16 %v656, %v653
    %v759 = vpack.c.b16 %v657, %v654
    %v760 = vpack.c.b16 %v661, %v658
    %v761 = vpack.c.b16 %v662, %v659
    %v762 = vpack.c.b16 %v663, %v660
    %v763 = vpack.c.b16 %v667, %v664
    %v764 = vpack.c.b16 %v668, %v665
    %v765 = vpack.c.b16 %v669, %v666
    %862 = vmatpush.bf16.msra.mxu0 %v691
    %863 = vmatpush.bf16.msra.mxu0 %v688
    %864 = vmatpush.bf16.msra.mxu0 %v685
    %865 = vmatpush.bf16.msra.mxu0 %v682
    %866 = vmatpush.bf16.msra.mxu0 %v679
    %867 = vmatpush.bf16.msra.mxu0 %v676
    %868 = vmatpush.bf16.msra.mxu0 %v673
    %869 = vmatpush.bf16.msra.mxu0 %v670
    %870 = vmatmul.bf16.gmra.mxu0 %v218
    %v871 = vpop.f32.mrf.mxu0
    %v872 = vadd.f32 0.0, %v871
    %v873 = vpop.f32.mrf.mxu0
    %874 = vdwg.mxu0
    %875 = vmatpush.bf16.msra.mxu0 %v715
    %876 = vmatpush.bf16.msra.mxu0 %v712
    %877 = vmatpush.bf16.msra.mxu0 %v709
    %878 = vmatpush.bf16.msra.mxu0 %v706
    %879 = vmatpush.bf16.msra.mxu0 %v703
    %880 = vmatpush.bf16.msra.mxu0 %v700
    %881 = vmatpush.bf16.msra.mxu0 %v697
    %882 = vmatpush.bf16.msra.mxu0 %v694
    %883 = vmatmul.bf16.gmra.mxu0 %v219
    %v884 = vpop.f32.mrf.mxu0
    %v885 = vadd.f32 %v872, %v884
    %v886 = vpop.f32.mrf.mxu0
    %887 = vdwg.mxu0
    %888 = vmatpush.bf16.msra.mxu0 %v739
    %889 = vmatpush.bf16.msra.mxu0 %v736
    %890 = vmatpush.bf16.msra.mxu0 %v733
    %891 = vmatpush.bf16.msra.mxu0 %v730
    %892 = vmatpush.bf16.msra.mxu0 %v727
    %893 = vmatpush.bf16.msra.mxu0 %v724
    %894 = vmatpush.bf16.msra.mxu0 %v721
    %895 = vmatpush.bf16.msra.mxu0 %v718
    %896 = vmatmul.bf16.gmra.mxu0 %v220
    %v897 = vpop.f32.mrf.mxu0
    %v898 = vadd.f32 %v885, %v897
    %v899 = vpop.f32.mrf.mxu0
    %900 = vdwg.mxu0
    %901 = vmatpush.bf16.msra.mxu0 %v763
    %902 = vmatpush.bf16.msra.mxu0 %v760
    %903 = vmatpush.bf16.msra.mxu0 %v757
    %904 = vmatpush.bf16.msra.mxu0 %v754
    %905 = vmatpush.bf16.msra.mxu0 %v751
    %906 = vmatpush.bf16.msra.mxu0 %v748
    %907 = vmatpush.bf16.msra.mxu0 %v745
    %908 = vmatpush.bf16.msra.mxu0 %v742
    %909 = vmatmul.bf16.gmra.mxu0 %v221
    %v910 = vpop.f32.mrf.mxu0
    %v911 = vadd.f32 %v898, %v910
    %v912 = vpop.f32.mrf.mxu0
    %913 = vdwg.mxu0
    %914 = vmatpush.bf16.msra.mxu0 %v692
    %915 = vmatpush.bf16.msra.mxu0 %v689
    %916 = vmatpush.bf16.msra.mxu0 %v686
    %917 = vmatpush.bf16.msra.mxu0 %v683
    %918 = vmatpush.bf16.msra.mxu0 %v680
    %919 = vmatpush.bf16.msra.mxu0 %v677
    %920 = vmatpush.bf16.msra.mxu0 %v674
    %921 = vmatpush.bf16.msra.mxu0 %v671
    %922 = vmatmul.bf16.gmra.mxu0 %v218
    %v923 = vpop.f32.mrf.mxu0
    %v924 = vadd.f32 0.0, %v923
    %v925 = vpop.f32.mrf.mxu0
    %926 = vdwg.mxu0
    %927 = vmatpush.bf16.msra.mxu0 %v716
    %928 = vmatpush.bf16.msra.mxu0 %v713
    %929 = vmatpush.bf16.msra.mxu0 %v710
    %930 = vmatpush.bf16.msra.mxu0 %v707
    %931 = vmatpush.bf16.msra.mxu0 %v704
    %932 = vmatpush.bf16.msra.mxu0 %v701
    %933 = vmatpush.bf16.msra.mxu0 %v698
    %934 = vmatpush.bf16.msra.mxu0 %v695
    %935 = vmatmul.bf16.gmra.mxu0 %v219
    %v936 = vpop.f32.mrf.mxu0
    %v937 = vadd.f32 %v924, %v936
    %v938 = vpop.f32.mrf.mxu0
    %939 = vdwg.mxu0
    %940 = vmatpush.bf16.msra.mxu0 %v740
    %941 = vmatpush.bf16.msra.mxu0 %v737
    %942 = vmatpush.bf16.msra.mxu0 %v734
    %943 = vmatpush.bf16.msra.mxu0 %v731
    %944 = vmatpush.bf16.msra.mxu0 %v728
    %945 = vmatpush.bf16.msra.mxu0 %v725
    %946 = vmatpush.bf16.msra.mxu0 %v722
    %947 = vmatpush.bf16.msra.mxu0 %v719
    %948 = vmatmul.bf16.gmra.mxu0 %v220
    %v949 = vpop.f32.mrf.mxu0
    %v950 = vadd.f32 %v937, %v949
    %v951 = vpop.f32.mrf.mxu0
    %952 = vdwg.mxu0
    %953 = vmatpush.bf16.msra.mxu0 %v764
    %954 = vmatpush.bf16.msra.mxu0 %v761
    %955 = vmatpush.bf16.msra.mxu0 %v758
    %956 = vmatpush.bf16.msra.mxu0 %v755
    %957 = vmatpush.bf16.msra.mxu0 %v752
    %958 = vmatpush.bf16.msra.mxu0 %v749
    %959 = vmatpush.bf16.msra.mxu0 %v746
    %960 = vmatpush.bf16.msra.mxu0 %v743
    %961 = vmatmul.bf16.gmra.mxu0 %v221
    %v962 = vpop.f32.mrf.mxu0
    %v963 = vadd.f32 %v950, %v962
    %v964 = vpop.f32.mrf.mxu0
    %965 = vdwg.mxu0
    %966 = vmatpush.bf16.msra.mxu0 %v693
    %967 = vmatpush.bf16.msra.mxu0 %v690
    %968 = vmatpush.bf16.msra.mxu0 %v687
    %969 = vmatpush.bf16.msra.mxu0 %v684
    %970 = vmatpush.bf16.msra.mxu0 %v681
    %971 = vmatpush.bf16.msra.mxu0 %v678
    %972 = vmatpush.bf16.msra.mxu0 %v675
    %973 = vmatpush.bf16.msra.mxu0 %v672
    %974 = vmatmul.bf16.gmra.mxu0 %v218
    %v975 = vpop.f32.mrf.mxu0
    %v976 = vadd.f32 0.0, %v975
    %v977 = vpop.f32.mrf.mxu0
    %978 = vdwg.mxu0
    %979 = vmatpush.bf16.msra.mxu0 %v717
    %980 = vmatpush.bf16.msra.mxu0 %v714
    %981 = vmatpush.bf16.msra.mxu0 %v711
    %982 = vmatpush.bf16.msra.mxu0 %v708
    %983 = vmatpush.bf16.msra.mxu0 %v705
    %984 = vmatpush.bf16.msra.mxu0 %v702
    %985 = vmatpush.bf16.msra.mxu0 %v699
    %986 = vmatpush.bf16.msra.mxu0 %v696
    %987 = vmatmul.bf16.gmra.mxu0 %v219
    %v988 = vpop.f32.mrf.mxu0
    %v989 = vadd.f32 %v976, %v988
    %v990 = vpop.f32.mrf.mxu0
    %991 = vdwg.mxu0
    %992 = vmatpush.bf16.msra.mxu0 %v741
    %993 = vmatpush.bf16.msra.mxu0 %v738
    %994 = vmatpush.bf16.msra.mxu0 %v735
    %995 = vmatpush.bf16.msra.mxu0 %v732
    %996 = vmatpush.bf16.msra.mxu0 %v729
    %997 = vmatpush.bf16.msra.mxu0 %v726
    %998 = vmatpush.bf16.msra.mxu0 %v723
    %999 = vmatpush.bf16.msra.mxu0 %v720
    %1000 = vmatmul.bf16.gmra.mxu0 %v220
    %v1001 = vpop.f32.mrf.mxu0
    %v1002 = vadd.f32 %v989, %v1001
    %v1003 = vpop.f32.mrf.mxu0
    %1004 = vdwg.mxu0
    %1005 = vmatpush.bf16.msra.mxu0 %v765
    %1006 = vmatpush.bf16.msra.mxu0 %v762
    %1007 = vmatpush.bf16.msra.mxu0 %v759
    %1008 = vmatpush.bf16.msra.mxu0 %v756
    %1009 = vmatpush.bf16.msra.mxu0 %v753
    %1010 = vmatpush.bf16.msra.mxu0 %v750
    %1011 = vmatpush.bf16.msra.mxu0 %v747
    %1012 = vmatpush.bf16.msra.mxu0 %v744
    %1013 = vmatmul.bf16.gmra.mxu0 %v221
    %v1014 = vpop.f32.mrf.mxu0
    %v1015 = vadd.f32 %v1002, %v1014
    %v1016 = vpop.f32.mrf.mxu0
    %1017 = vdwg.mxu0
    %v1018 = vpack.c.bf16 %v963, %v911
    %v1019 = vpack.c.bf16 %v1015, %v1015
    %v1020 = vld [vmem:[%s4] sm:$0x7]
    %v1022 = vperm.slane %v1020, 0
    %v1023 = vperm.slane %v1020, 1
    %v1024 = vperm.slane %v1020, 2
    %v1028 = vpack.c.bf16 %v1023, %v1022
    %v1029 = vpack.c.bf16 %v1024, %v1024
    %v1032 = vunpack.c.l.b16 %v1028
    %v1033 = vunpack.c.h.b16 %v1028
    %v1034 = vunpack.c.l.b16 %v1029
    %v1035 = vpack.c.b16 %v1032, %v1032
    %v1036 = vpack.c.b16 %v1033, %v1033
    %v1037 = vpack.c.b16 %v1034, %v1034
    %v1039 = vpack.i.b16 %v1035, %v1035
    %v1041 = vperm.slane %v1039, 0
    %v1043 = vpack.i.b16 %v1036, %v1036
    %v1045 = vperm.slane %v1043, 0
    %v1047 = vpack.i.b16 %v1037, %v1037
    %v1049 = vperm.slane %v1047, 0
    %v1050 = vunpack.c.l.bf16 %v1018
    %v1051 = vunpack.c.h.bf16 %v1018
    %v1052 = vunpack.c.l.bf16 %v1019
    %v1053 = vunpack.c.l.bf16 %v1041
    %v1054 = vunpack.c.l.bf16 %v1045
    %v1055 = vunpack.c.l.bf16 %v1049
    %v1056 = vadd.f32 %v1050, %v1053
    %v1057 = vadd.f32 %v1051, %v1054
    %v1058 = vadd.f32 %v1052, %v1055
    %v1059 = vpack.c.bf16 %v1057, %v1056
    %v1060 = vpack.c.bf16 %v1058, %v1058
    %v1061 = vunpack.c.l.bf16 %v1059
    %v1062 = vunpack.c.h.bf16 %v1059
    %v1063 = vunpack.c.l.bf16 %v1060
    %v1064 = vmax.f32 %v1061, 0.0
    %v1065 = vmax.f32 %v1062, 0.0
    %v1066 = vmax.f32 %v1063, 0.0
    %v1067 = vpack.c.bf16 %v1064, %v1064
    %v1068 = vpack.c.bf16 %v1065, %v1065
    %v1069 = vpack.c.bf16 %v1066, %v1066
    %v1070 = vld [vmem:[#allocation6] sm:$0xf]
    %v1071 = vld [vmem:[#allocation6 + $0x4] sm:$0xf]
    %v1072 = vld [vmem:[#allocation6 + $0x8] sm:$0xf]
    %v1073 = vld [vmem:[#allocation6 + $0xc] sm:$0xf]
    %v1074 = vld [vmem:[#allocation6 + $0x10] sm:$0xf]
    %v1075 = vld [vmem:[#allocation6 + $0x14] sm:$0xf]
    %v1076 = vld [vmem:[#allocation6 + $0x18] sm:$0xf]
    %v1077 = vld [vmem:[#allocation6 + $0x1c] sm:$0xf]
    %v1078 = vld [vmem:[#allocation6 + $0x20] sm:$0xf]
    %v1079 = vld [vmem:[#allocation6 + $0x24] sm:$0xf]
    %v1080 = vld [vmem:[#allocation6 + $0x28] sm:$0xf]
    %v1081 = vld [vmem:[#allocation6 + $0x2c] sm:$0xf]
    %v1082 = vld [vmem:[#allocation6 + $0x30] sm:$0xf]
    %v1083 = vld [vmem:[#allocation6 + $0x34] sm:$0xf]
    %v1084 = vld [vmem:[#allocation6 + $0x38] sm:$0xf]
    %v1085 = vld [vmem:[#allocation6 + $0x3c] sm:$0xf]
    %v1086 = vld [vmem:[#allocation6 + $0x40] sm:$0xf]
    %v1087 = vld [vmem:[#allocation6 + $0x44] sm:$0xf]
    %v1088 = vld [vmem:[#allocation6 + $0x48] sm:$0xf]
    %v1089 = vld [vmem:[#allocation6 + $0x4c] sm:$0xf]
    %v1090 = vld [vmem:[#allocation6 + $0x50] sm:$0xf]
    %v1091 = vld [vmem:[#allocation6 + $0x54] sm:$0xf]
    %v1092 = vld [vmem:[#allocation6 + $0x58] sm:$0xf]
    %v1093 = vld [vmem:[#allocation6 + $0x5c] sm:$0xf]
    %v1094 = vld [vmem:[#allocation6 + $0x60] sm:$0xf]
    %v1095 = vld [vmem:[#allocation6 + $0x64] sm:$0xf]
    %v1096 = vld [vmem:[#allocation6 + $0x68] sm:$0xf]
    %v1097 = vld [vmem:[#allocation6 + $0x6c] sm:$0xf]
    %v1098 = vld [vmem:[#allocation6 + $0x70] sm:$0xf]
    %v1099 = vld [vmem:[#allocation6 + $0x74] sm:$0xf]
    %v1100 = vld [vmem:[#allocation6 + $0x78] sm:$0xf]
    %v1101 = vld [vmem:[#allocation6 + $0x7c] sm:$0xf]
    %v1102 = vld [vmem:[#allocation6 + $0x80] sm:$0xf]
    %v1103 = vld [vmem:[#allocation6 + $0x84] sm:$0xf]
    %v1104 = vld [vmem:[#allocation6 + $0x88] sm:$0xf]
    %v1105 = vld [vmem:[#allocation6 + $0x8c] sm:$0xf]
    %v1106 = vld [vmem:[#allocation6 + $0x90] sm:$0xf]
    %v1107 = vld [vmem:[#allocation6 + $0x94] sm:$0xf]
    %v1108 = vld [vmem:[#allocation6 + $0x98] sm:$0xf]
    %v1109 = vld [vmem:[#allocation6 + $0x9c] sm:$0xf]
    %v1110 = vld [vmem:[#allocation6 + $0xa0] sm:$0xf]
    %v1111 = vld [vmem:[#allocation6 + $0xa4] sm:$0xf]
    %v1112 = vld [vmem:[#allocation6 + $0xa8] sm:$0xf]
    %v1113 = vld [vmem:[#allocation6 + $0xac] sm:$0xf]
    %v1114 = vld [vmem:[#allocation6 + $0xb0] sm:$0xf]
    %v1115 = vld [vmem:[#allocation6 + $0xb4] sm:$0xf]
    %v1116 = vld [vmem:[#allocation6 + $0xb8] sm:$0xf]
    %v1117 = vld [vmem:[#allocation6 + $0xbc] sm:$0xf]
    %v1118 = vld [vmem:[%s6] sm:$0x1]
    %v1120 = vperm.slane %v1118, 0
    %v1170 = vunpack.c.l.b16 %v1070
    %v1171 = vunpack.c.l.b16 %v1071
    %v1172 = vunpack.c.l.b16 %v1072
    %v1173 = vunpack.c.l.b16 %v1073
    %v1174 = vunpack.c.l.b16 %v1074
    %v1175 = vunpack.c.l.b16 %v1075
    %v1176 = vunpack.c.l.b16 %v1076
    %v1177 = vunpack.c.l.b16 %v1077
    %v1178 = vunpack.c.l.b16 %v1078
    %v1179 = vunpack.c.l.b16 %v1079
    %v1180 = vunpack.c.l.b16 %v1080
    %v1181 = vunpack.c.l.b16 %v1081
    %v1182 = vunpack.c.l.b16 %v1082
    %v1183 = vunpack.c.l.b16 %v1083
    %v1184 = vunpack.c.l.b16 %v1084
    %v1185 = vunpack.c.l.b16 %v1085
    %v1186 = vunpack.c.l.b16 %v1086
    %v1187 = vunpack.c.l.b16 %v1087
    %v1188 = vunpack.c.l.b16 %v1088
    %v1189 = vunpack.c.l.b16 %v1089
    %v1190 = vunpack.c.l.b16 %v1090
    %v1191 = vunpack.c.l.b16 %v1091
    %v1192 = vunpack.c.l.b16 %v1092
    %v1193 = vunpack.c.l.b16 %v1093
    %v1194 = vunpack.c.l.b16 %v1094
    %v1195 = vunpack.c.l.b16 %v1095
    %v1196 = vunpack.c.l.b16 %v1096
    %v1197 = vunpack.c.l.b16 %v1097
    %v1198 = vunpack.c.l.b16 %v1098
    %v1199 = vunpack.c.l.b16 %v1099
    %v1200 = vunpack.c.l.b16 %v1100
    %v1201 = vunpack.c.l.b16 %v1101
    %v1202 = vunpack.c.l.b16 %v1102
    %v1203 = vunpack.c.l.b16 %v1103
    %v1204 = vunpack.c.l.b16 %v1104
    %v1205 = vunpack.c.l.b16 %v1105
    %v1206 = vunpack.c.l.b16 %v1106
    %v1207 = vunpack.c.l.b16 %v1107
    %v1208 = vunpack.c.l.b16 %v1108
    %v1209 = vunpack.c.l.b16 %v1109
    %v1210 = vunpack.c.l.b16 %v1110
    %v1211 = vunpack.c.l.b16 %v1111
    %v1212 = vunpack.c.l.b16 %v1112
    %v1213 = vunpack.c.l.b16 %v1113
    %v1214 = vunpack.c.l.b16 %v1114
    %v1215 = vunpack.c.l.b16 %v1115
    %v1216 = vunpack.c.l.b16 %v1116
    %v1217 = vunpack.c.l.b16 %v1117
    %v1218 = vpack.c.b16 %v1171, %v1170
    %v1219 = vpack.c.b16 %v1173, %v1172
    %v1220 = vpack.c.b16 %v1175, %v1174
    %v1221 = vpack.c.b16 %v1177, %v1176
    %v1222 = vpack.c.b16 %v1179, %v1178
    %v1223 = vpack.c.b16 %v1181, %v1180
    %v1224 = vpack.c.b16 %v1183, %v1182
    %v1225 = vpack.c.b16 %v1185, %v1184
    %v1226 = vpack.c.b16 %v1187, %v1186
    %v1227 = vpack.c.b16 %v1189, %v1188
    %v1228 = vpack.c.b16 %v1191, %v1190
    %v1229 = vpack.c.b16 %v1193, %v1192
    %v1230 = vpack.c.b16 %v1195, %v1194
    %v1231 = vpack.c.b16 %v1197, %v1196
    %v1232 = vpack.c.b16 %v1199, %v1198
    %v1233 = vpack.c.b16 %v1201, %v1200
    %v1234 = vpack.c.b16 %v1203, %v1202
    %v1235 = vpack.c.b16 %v1205, %v1204
    %v1236 = vpack.c.b16 %v1207, %v1206
    %v1237 = vpack.c.b16 %v1209, %v1208
    %v1238 = vpack.c.b16 %v1211, %v1210
    %v1239 = vpack.c.b16 %v1213, %v1212
    %v1240 = vpack.c.b16 %v1215, %v1214
    %v1241 = vpack.c.b16 %v1217, %v1216
    %1266 = vmatpush.bf16.msra.mxu0 %v1225
    %1267 = vmatpush.bf16.msra.mxu0 %v1224
    %1268 = vmatpush.bf16.msra.mxu0 %v1223
    %1269 = vmatpush.bf16.msra.mxu0 %v1222
    %1270 = vmatpush.bf16.msra.mxu0 %v1221
    %1271 = vmatpush.bf16.msra.mxu0 %v1220
    %1272 = vmatpush.bf16.msra.mxu0 %v1219
    %1273 = vmatpush.bf16.msra.mxu0 %v1218
    %1274 = vmatmul.bf16.gmra.mxu0 %v1067
    %v1275 = vpop.f32.mrf.mxu0
    %v1276 = vadd.f32 %v1120, %v1275
    %v1277 = vpop.f32.mrf.mxu0
    %1278 = vdwg.mxu0
    %1279 = vmatpush.bf16.msra.mxu0 %v1233
    %1280 = vmatpush.bf16.msra.mxu0 %v1232
    %1281 = vmatpush.bf16.msra.mxu0 %v1231
    %1282 = vmatpush.bf16.msra.mxu0 %v1230
    %1283 = vmatpush.bf16.msra.mxu0 %v1229
    %1284 = vmatpush.bf16.msra.mxu0 %v1228
    %1285 = vmatpush.bf16.msra.mxu0 %v1227
    %1286 = vmatpush.bf16.msra.mxu0 %v1226
    %1287 = vmatmul.bf16.gmra.mxu0 %v1068
    %v1288 = vpop.f32.mrf.mxu0
    %v1289 = vadd.f32 %v1276, %v1288
    %v1290 = vpop.f32.mrf.mxu0
    %1291 = vdwg.mxu0
    %1292 = vmatpush.bf16.msra.mxu0 %v1241
    %1293 = vmatpush.bf16.msra.mxu0 %v1240
    %1294 = vmatpush.bf16.msra.mxu0 %v1239
    %1295 = vmatpush.bf16.msra.mxu0 %v1238
    %1296 = vmatpush.bf16.msra.mxu0 %v1237
    %1297 = vmatpush.bf16.msra.mxu0 %v1236
    %1298 = vmatpush.bf16.msra.mxu0 %v1235
    %1299 = vmatpush.bf16.msra.mxu0 %v1234
    %1300 = vmatmul.bf16.gmra.mxu0 %v1069
    %v1301 = vpop.f32.mrf.mxu0
    %v1302 = vadd.f32 %v1289, %v1301
    %v1303 = vpop.f32.mrf.mxu0
    %1304 = vdwg.mxu0
    %1305 = vmax.xlane.f32.xlu0 %v1302
    %v1306 = vpop.xlane.xlu0 %1305
    %v1307 = vsub.f32 %v1302, %v1306
    %v1308 = vmul.f32 %v1307, 1.442695
    %v1309 = vpow.pop %v1308
    %1310 = vadd.xlane.f32.xlu0 %v1309
    %v1311 = vpop.xlane.xlu0 %1310
    %v1312 = vrcp.pop %v1311
    %v1313 = vmul.f32 %v1311, %v1312
    %v1314 = vsub.f32 1.0, %v1313
    %v1315 = vmul.f32 %v1312, %v1314
    %v1316 = vadd.f32 %v1312, %v1315
    %vm1317 = vweird.f32 %v1311
    %vm1318 = vweird.f32 %v1312
    %vm1319 = vmor %vm1317, %vm1318
    %v1320 = vsel %vm1319, %v1312, %v1316
    %v1321 = vand.u32 2147483647, %v1311
    %vm1322 = vcmp.eq.f32.partialorder %v1321, 8.507059e+37
    %v1323 = vand.u32 %v1311, 2147483648
    %v1324 = vor.u32 1.1754944e-38, %v1323
    %v1325 = vsel %vm1322, %v1324, %v1320
    %v1326 = vmul.f32 %v1309, %v1325
    %1327 = vst [vmem:[%s7] sm:$0xff] %v1326
    // Predicated region
    $region42: #{_actor_forward_impl.1} parent=1 // pred_check
      _
    $region43: #{_actor_forward_impl.1} parent=1 // pred_check_branch
      %1329 = sbr.rel (0) target = $region45
    $region44: #{_actor_forward_impl.1} parent=1 // pred_region
      _
    $region45: #{_actor_forward_impl.1} parent=1 // pred_fallthru
      _
    // Predicated region
    $region46: #{_actor_forward_impl.1} parent=1 // pred_check
      _
    $region47: #{_actor_forward_impl.1} parent=1 // pred_check_branch
      %1331 = sbr.rel (0) target = $region49
    $region48: #{_actor_forward_impl.1} parent=1 // pred_region
      _
    $region49: #{_actor_forward_impl.1} parent=1 // pred_fallthru
      _
    %1332 = vsyncpa [#allocation3], 1
    %1333 = vsyncpa [#allocation5], 1

</llo_original>
